<compile_context>
chip_gen: v5e
topology: v5e:2x2
jax: 0.10.0
libtpu: 0.0.40
codegen_flags: <defaults>
</compile_context>

<pallas_src>
import jax
import jax.numpy as jnp
from jax.scipy.linalg import block_diag
from jax.experimental import pallas as pl
from jax.experimental.pallas import tpu as pltpu

EPS = 1e-5  # nn.GroupNorm default eps


def _round_up(x, m):
    return ((x + m - 1) // m) * m


# ---------------------------------------------------------------------------
# GroupNorm(ng=1) applied independently to each mode's A-lane group of a
# (rows, M*A) f32 tensor.  Group mean and second moment come from a single
# fused [x | x*x] @ blockdiag(S, S) MXU matmul; elementwise math stays f32.
# ---------------------------------------------------------------------------
def _gn_grouped(x, s2, g, b):
    MA = x.shape[-1]
    stats_in = jnp.concatenate([x, x * x], axis=-1).astype(jnp.bfloat16)
    stats = jnp.dot(stats_in, s2, preferred_element_type=jnp.float32)
    mu = stats[:, :MA]
    var = jnp.maximum(stats[:, MA:] - mu * mu, 0.0)   # guard tiny negatives
    return (x - mu) * jax.lax.rsqrt(var + EPS) * g + b


# ---------------------------------------------------------------------------
# Fused kernel: num_mods prediction heads + AttDest + cls, all modes on the
# 128-lane axis.  Outputs: raw reg slab (rows, C) and cls slab (rows, 128).
# ---------------------------------------------------------------------------
def _prednet_kernel(x_ref, w1_ref, w2_ref, w3_ref, s2_ref, vec1_ref, b3_ref,
                    wsel_ref, waa_ref, wbd_ref, wc3_ref, vec2_ref, bc3_ref,
                    reg_ref, cls_ref):
    MA = w2_ref.shape[0]
    s2 = s2_ref[...]                                     # bf16 blockdiag(S, S)
    xb = x_ref[...].astype(jnp.bfloat16)                 # (T, A)

    # ---- prediction heads: LinearRes(A, A; GN ng=1) + Linear(A, 2*num_preds)
    #      for every mode at once (MA = M*A lanes) ----
    g1, b1 = vec1_ref[0:1, :], vec1_ref[1:2, :]
    g2, b2 = vec1_ref[2:3, :], vec1_ref[3:4, :]
    # one MXU push: [W1 of every mode | identity tiles for the residual input]
    h_all = jnp.dot(xb, w1_ref[...], preferred_element_type=jnp.float32)   # (T, 2MA)
    h, x_rep = h_all[:, :MA], h_all[:, MA:]
    h = jnp.maximum(_gn_grouped(h, s2, g1, b1), 0.0)
    h = jnp.dot(h.astype(jnp.bfloat16), w2_ref[...],
                preferred_element_type=jnp.float32)                        # block-diag W2
    h = _gn_grouped(h, s2, g2, b2)
    h = jnp.maximum(h + x_rep, 0.0)
    reg = jnp.dot(h.astype(jnp.bfloat16), w3_ref[...],
                  preferred_element_type=jnp.float32) + b3_ref[...]        # (T, C)
    reg_ref[...] = reg

    # ---- AttDest + cls head, also mode-fused on the lane axis ----
    # dist = agt_ctrs - dest_ctrs == -reg_raw[..., last point, :]; the column
    # selection, negation and nn.Linear(2, A) are all folded into `wsel`.
    bd1, gd2, bd2 = vec2_ref[0:1, :], vec2_ref[1:2, :], vec2_ref[2:3, :]
    ga, ba = vec2_ref[3:4, :], vec2_ref[4:5, :]
    gc1, bc1 = vec2_ref[5:6, :], vec2_ref[6:7, :]
    gc2, bc2 = vec2_ref[7:8, :], vec2_ref[8:9, :]

    d = jnp.maximum(jnp.dot(reg.astype(jnp.bfloat16), wsel_ref[...],
                            preferred_element_type=jnp.float32) + bd1, 0.0)
    d = jnp.dot(d.astype(jnp.bfloat16), wbd_ref[0],
                preferred_element_type=jnp.float32)
    d = jnp.maximum(_gn_grouped(d, s2, gd2, bd2), 0.0)

    # agt = Linear(2A, A): concat(dist_feat, actors) @ W == d @ W_d + x @ W_a
    f = (jnp.dot(d.astype(jnp.bfloat16), wbd_ref[1],
                 preferred_element_type=jnp.float32)
         + jnp.dot(xb, waa_ref[...], preferred_element_type=jnp.float32))
    feats = jnp.maximum(_gn_grouped(f, s2, ga, ba), 0.0)

    # cls: LinearRes(A, A) + nn.Linear(A, 1) per mode; output lane-padded
    c = jnp.dot(feats.astype(jnp.bfloat16), wbd_ref[2],
                preferred_element_type=jnp.float32)
    c = jnp.maximum(_gn_grouped(c, s2, gc1, bc1), 0.0)
    c = jnp.dot(c.astype(jnp.bfloat16), wbd_ref[3],
                preferred_element_type=jnp.float32)
    c = _gn_grouped(c, s2, gc2, bc2)
    c = jnp.maximum(c + feats, 0.0)
    cls_ref[...] = jnp.dot(c.astype(jnp.bfloat16), wc3_ref[...],
                           preferred_element_type=jnp.float32) + bc3_ref[...]


# ---------------------------------------------------------------------------
# Offline weight packing: fuse the per-mode heads onto the lane axis and cast
# every MXU operand to bfloat16 once (not per grid step).
# ---------------------------------------------------------------------------
def prepare_params(p, A, M, P):
    P2 = 2 * P
    MA = M * A
    C = _round_up(M * P2, 128)        # lane-dense width of the reg output
    OUTW = _round_up(M, 128)          # lane-dense width of the cls output
    bf = lambda a: a.astype(jnp.bfloat16)

    # -- prediction heads --
    w1cat = jnp.transpose(p["pred_w1"], (1, 0, 2)).reshape(A, MA)
    rep = jnp.tile(jnp.eye(A, dtype=jnp.float32), (1, M))     # residual replication
    w1aug = jnp.concatenate([w1cat, rep], axis=1)             # (A, 2*MA): one MXU push
    w2bd = block_diag(*[p["pred_w2"][m] for m in range(M)])
    w3bd = jnp.pad(block_diag(*[p["pred_w3"][m] for m in range(M)]),
                   ((0, 0), (0, C - M * P2)))
    b3 = jnp.pad(p["pred_b3"].reshape(1, M * P2), ((0, 0), (0, C - M * P2)))
    vec1 = jnp.concatenate([p["pred_g1"].reshape(1, MA), p["pred_b1"].reshape(1, MA),
                            p["pred_g2"].reshape(1, MA), p["pred_b2"].reshape(1, MA)],
                           axis=0)                             # (4, MA)

    # group-average matrix for per-mode GroupNorm(ng=1); doubled block-diagonal
    # so [x | x*x] @ s2 yields [mean | E[x^2]] in a single matmul
    S = jnp.kron(jnp.eye(M, dtype=jnp.float32),
                 jnp.full((A, A), 1.0 / A, jnp.float32))
    s2 = block_diag(S, S)                                      # (2MA, 2MA)

    # -- AttDest + cls --
    # wsel folds (a) selecting the last predicted point of every mode from the
    # raw reg slab, (b) dist = agt_ctrs - dest_ctrs = -reg_raw[..., -1, :] and
    # (c) nn.Linear(2, A), into one (C, MA) matrix.
    wsel = jnp.zeros((C, MA), jnp.float32)
    for m in range(M):
        cx, cy = m * P2 + P2 - 2, m * P2 + P2 - 1
        wsel = wsel.at[cx, m * A:(m + 1) * A].set(-p["wd1"][0])
        wsel = wsel.at[cy, m * A:(m + 1) * A].set(-p["wd1"][1])
    waa_rep = jnp.tile(p["waa"], (1, M))                       # (A, MA)
    wbd = jnp.stack([block_diag(*([p["wd2"]] * M)),
                     block_diag(*([p["wad"]] * M)),
                     block_diag(*([p["wc1"]] * M)),
                     block_diag(*([p["wc2"]] * M))], axis=0)   # (4, MA, MA)
    wc3b = jnp.zeros((MA, OUTW), jnp.float32)
    for m in range(M):
        wc3b = wc3b.at[m * A:(m + 1) * A, m].set(p["wc3"][0])
    bc3row = jnp.zeros((1, OUTW), jnp.float32).at[0, :M].set(p["bc3"][0, 0])
    tiled = lambda v: jnp.tile(v.reshape(1, A), (1, M))
    vec2 = jnp.concatenate([tiled(p["bd1"]), tiled(p["gd2"]), tiled(p["bd2"]),
                            tiled(p["ga"]), tiled(p["ba"]),
                            tiled(p["gc1"]), tiled(p["bc1"]),
                            tiled(p["gc2"]), tiled(p["bc2"])], axis=0)   # (9, MA)

    return dict(A=A, M=M, P=P, MA=MA, C=C, OUTW=OUTW,
                w1aug=bf(w1aug), w2bd=bf(w2bd), w3bd=bf(w3bd), s2=bf(s2),
                vec1=vec1, b3=b3, wsel=bf(wsel), waa_rep=bf(waa_rep),
                wbd=bf(wbd), wc3b=bf(wc3b), vec2=vec2, bc3row=bc3row)


# ---------------------------------------------------------------------------
# Core forward: one fused pallas_call -> (cls (N, M), reg (N, M, P, 2)).
# ---------------------------------------------------------------------------
def _pred_core(fp, actors, actor_ctrs):
    N, A = actors.shape
    M, P, MA = fp["M"], fp["P"], fp["MA"]
    P2 = 2 * P
    C, OUTW = fp["C"], fp["OUTW"]

    # Row tiling: biggest tile up to 1024 rows, but at least 2 tiles for
    # moderate N so the "parallel" row axis shards across both TensorCores on
    # v7x (no cost on single-TC v5e/v6e).
    row_tile = min(1024, max(8, _round_up((N + 1) // 2, 8)))
    Npad = _round_up(N, row_tile)
    nt = Npad // row_tile
    actors_pad = jnp.pad(actors, ((0, Npad - N), (0, 0)))

    rows = lambda i: (i, 0)
    cw = lambda i: (0, 0)       # constant index map: weights stay VMEM-resident
    cw3 = lambda i: (0, 0, 0)

    reg_flat, cls_pad = pl.pallas_call(
        _prednet_kernel,
        out_shape=(jax.ShapeDtypeStruct((Npad, C), jnp.float32),
                   jax.ShapeDtypeStruct((Npad, OUTW), jnp.float32)),
        grid=(nt,),
        in_specs=[
            pl.BlockSpec((row_tile, A), rows),       # actors (f32)
            pl.BlockSpec((A, 2 * MA), cw),           # [W1 all modes | residual id]
            pl.BlockSpec((MA, MA), cw),              # W2 block-diag
            pl.BlockSpec((MA, C), cw),               # W3 block-diag (lane-padded)
            pl.BlockSpec((2 * MA, 2 * MA), cw),      # blockdiag(S, S)
            pl.BlockSpec((4, MA), cw),               # [g1;b1;g2;b2]
            pl.BlockSpec((1, C), cw),                # b3 (lane-padded)
            pl.BlockSpec((C, MA), cw),               # dist-select + Linear(2, A)
            pl.BlockSpec((A, MA), cw),               # waa tiled over modes
            pl.BlockSpec((4, MA, MA), cw3),          # [wd2, wad, wc1, wc2] block-diag
            pl.BlockSpec((MA, OUTW), cw),            # wc3 block (lane-padded)
            pl.BlockSpec((9, MA), cw),               # AttDest/cls gammas, betas, biases
            pl.BlockSpec((1, OUTW), cw),             # bc3 row (lane-padded)
        ],
        out_specs=(pl.BlockSpec((row_tile, C), rows),
                   pl.BlockSpec((row_tile, OUTW), rows)),
        compiler_params=pltpu.CompilerParams(
            dimension_semantics=("parallel",),
            vmem_limit_bytes=32 * 1024 * 1024),
    )(actors_pad, fp["w1aug"], fp["w2bd"], fp["w3bd"], fp["s2"], fp["vec1"],
      fp["b3"], fp["wsel"], fp["waa_rep"], fp["wbd"], fp["wc3b"], fp["vec2"],
      fp["bc3row"])

    agt_ctrs = jnp.concatenate(actor_ctrs, axis=0)                 # (N, 2)
    reg = reg_flat[:N, :M * P2].reshape(N, M, P, 2) + agt_ctrs[:, None, None, :]
    cls = cls_pad[:N, :M]
    return cls, reg


def _sort_and_split(cls, reg, actor_idcs):
    # descending sort over modes + gather trajectories accordingly (glue)
    sort_idcs = jnp.argsort(-cls, axis=1)
    cls_s = jnp.take_along_axis(cls, sort_idcs, axis=1)
    reg_s = jnp.take_along_axis(reg, sort_idcs[:, :, None, None], axis=1)
    out = {"cls": [], "reg": []}
    for idcs in actor_idcs:
        out["cls"].append(cls_s[idcs])
        out["reg"].append(reg_s[idcs])
    return out


def pred_net_tnt_forward(fp, actors, actor_idcs, actor_ctrs):
    cls, reg = _pred_core(fp, actors, actor_ctrs)
    return _sort_and_split(cls, reg, actor_idcs)


# ---------------------------------------------------------------------------
# Deterministic synthetic parameters (shapes follow the PyTorch __init__).
# All linear weights are stored pre-transposed as (in_features, out_features).
# ---------------------------------------------------------------------------
def init_params(key, A, M, P):
    P2 = 2 * P
    ks = iter(jax.random.split(key, 32))

    def w(shape, scale=0.1):
        return scale * jax.random.normal(next(ks), shape, jnp.float32)

    return dict(
        # num_mods prediction heads, stacked on a leading mode axis
        pred_w1=w((M, A, A)), pred_g1=1.0 + w((M, 1, A)), pred_b1=w((M, 1, A)),
        pred_w2=w((M, A, A)), pred_g2=1.0 + w((M, 1, A)), pred_b2=w((M, 1, A)),
        pred_w3=w((M, A, P2)), pred_b3=w((M, 1, P2)),
        # AttDest.dist: nn.Linear(2, A) (+bias) -> ReLU -> Linear(A, A, GN, ReLU)
        wd1=w((2, A)), bd1=w((1, A)),
        wd2=w((A, A)), gd2=1.0 + w((1, A)), bd2=w((1, A)),
        # AttDest.agt: Linear(2A, A, GN, ReLU); weight split into dist/agt halves
        wad=w((A, A)), waa=w((A, A)), ga=1.0 + w((1, A)), ba=w((1, A)),
        # cls: LinearRes(A, A) + nn.Linear(A, 1)
        wc1=w((A, A)), gc1=1.0 + w((1, A)), bc1=w((1, A)),
        wc2=w((A, A)), gc2=1.0 + w((1, A)), bc2=w((1, A)),
        wc3=w((1, A)), bc3=w((1, 1)),
    )


# ---------------------------------------------------------------------------
# Pure-JAX f32 reference (mirrors the PyTorch forward) for a correctness check.
# ---------------------------------------------------------------------------
def _gn_ref(x, g, b):
    m = x.mean(-1, keepdims=True)
    v = ((x - m) ** 2).mean(-1, keepdims=True)
    return (x - m) / jnp.sqrt(v + EPS) * g + b


def reference_core(p, actors, actor_ctrs, M, P):
    N, A = actors.shape
    preds = []
    for m in range(M):
        h = actors @ p["pred_w1"][m]
        h = jnp.maximum(_gn_ref(h, p["pred_g1"][m], p["pred_b1"][m]), 0.0)
        h = h @ p["pred_w2"][m]
        h = _gn_ref(h, p["pred_g2"][m], p["pred_b2"][m])
        h = jnp.maximum(h + actors, 0.0)
        preds.append(h @ p["pred_w3"][m] + p["pred_b3"][m])
    reg = jnp.stack(preds, axis=1).reshape(N, M, P, 2)
    agt_ctrs = jnp.concatenate(actor_ctrs, 0)
    reg = reg + agt_ctrs[:, None, None, :]
    dest_ctrs = reg[:, :, -1]
    dist = (agt_ctrs[:, None, :] - dest_ctrs).reshape(-1, 2)
    d = jnp.maximum(dist @ p["wd1"] + p["bd1"], 0.0)
    d = jnp.maximum(_gn_ref(d @ p["wd2"], p["gd2"], p["bd2"]), 0.0)
    arep = jnp.broadcast_to(actors[:, None, :], (N, M, A)).reshape(-1, A)
    f = d @ p["wad"] + arep @ p["waa"]
    feats = jnp.maximum(_gn_ref(f, p["ga"], p["ba"]), 0.0)
    c = feats @ p["wc1"]
    c = jnp.maximum(_gn_ref(c, p["gc1"], p["bc1"]), 0.0)
    c = c @ p["wc2"]
    c = _gn_ref(c, p["gc2"], p["bc2"])
    c = jnp.maximum(c + feats, 0.0)
    cls = (c @ p["wc3"].T + p["bc3"]).reshape(N, M)
    return cls, reg


if __name__ == "__main__":
    # small config: n_actor=32, num_mods=4, num_preds=6; two "batches" of actors
    A, M, P = 32, 4, 6
    n0, n1 = 5, 3
    N = n0 + n1

    key = jax.random.PRNGKey(0)
    kp, ka, kc = jax.random.split(key, 3)
    params = init_params(kp, A, M, P)
    fused = prepare_params(params, A, M, P)
    actors = jax.random.normal(ka, (N, A), jnp.float32)
    ctrs_all = 5.0 * jax.random.normal(kc, (N, 2), jnp.float32)

    actor_idcs = [jnp.arange(0, n0), jnp.arange(n0, N)]
    actor_ctrs = [ctrs_all[:n0], ctrs_all[n0:]]

    # run the fused kernel + the full forward (sort/split glue)
    cls_k, reg_k = _pred_core(fused, actors, actor_ctrs)
    out = pred_net_tnt_forward(fused, actors, actor_idcs, actor_ctrs)
    (cls_k, reg_k, out) = jax.block_until_ready((cls_k, reg_k, out))

    # parity vs. the f32 reference.  bf16 MXU operands -> looser tolerance than
    # the old all-f32 version; compare the pre-sort cls/reg so a near-tie in
    # cls cannot flip the mode ordering of the comparison.
    cls_r, reg_r = reference_core(params, actors, actor_ctrs, M, P)
    assert jnp.allclose(reg_k, reg_r, atol=5e-2, rtol=5e-2), "reg mismatch"
    assert jnp.allclose(cls_k, cls_r, atol=1e-1, rtol=5e-2), "cls mismatch"

    print("KERNEL_OK")
</pallas_src>

<mosaic_0001>
module attributes {stable_mosaic.version = 11 : i64} {
  func.func @_prednet_kernel(%arg0: i32, %arg1: memref<8x32xf32, #tpu.memory_space<vmem>>, %arg2: memref<32x256xbf16, #tpu.memory_space<vmem>>, %arg3: memref<128x128xbf16, #tpu.memory_space<vmem>>, %arg4: memref<128x128xbf16, #tpu.memory_space<vmem>>, %arg5: memref<256x256xbf16, #tpu.memory_space<vmem>>, %arg6: memref<4x128xf32, #tpu.memory_space<vmem>>, %arg7: memref<1x128xf32, #tpu.memory_space<vmem>>, %arg8: memref<128x128xbf16, #tpu.memory_space<vmem>>, %arg9: memref<32x128xbf16, #tpu.memory_space<vmem>>, %arg10: memref<4x128x128xbf16, #tpu.memory_space<vmem>>, %arg11: memref<128x128xbf16, #tpu.memory_space<vmem>>, %arg12: memref<9x128xf32, #tpu.memory_space<vmem>>, %arg13: memref<1x128xf32, #tpu.memory_space<vmem>>, %arg14: memref<8x128xf32, #tpu.memory_space<vmem>>, %arg15: memref<8x128xf32, #tpu.memory_space<vmem>>) attributes {dimension_semantics = [#tpu.dimension_semantics<parallel>], iteration_bounds = array<i64: 1>, scalar_prefetch = 0 : i64, scratch_operands = 0 : i64, tpu.core_type = #tpu.core_type<tc>, window_params = [{transform_indices = @transform_0, window_bounds = array<i64: 8, 32>}, {pipeline_mode = #tpu.pipeline_mode<synchronous>, transform_indices = @transform_1, window_bounds = array<i64: 32, 256>}, {pipeline_mode = #tpu.pipeline_mode<synchronous>, transform_indices = @transform_2, window_bounds = array<i64: 128, 128>}, {pipeline_mode = #tpu.pipeline_mode<synchronous>, transform_indices = @transform_3, window_bounds = array<i64: 128, 128>}, {pipeline_mode = #tpu.pipeline_mode<synchronous>, transform_indices = @transform_4, window_bounds = array<i64: 256, 256>}, {pipeline_mode = #tpu.pipeline_mode<synchronous>, transform_indices = @transform_5, window_bounds = array<i64: 4, 128>}, {pipeline_mode = #tpu.pipeline_mode<synchronous>, transform_indices = @transform_6, window_bounds = array<i64: 1, 128>}, {pipeline_mode = #tpu.pipeline_mode<synchronous>, transform_indices = @transform_7, window_bounds = array<i64: 128, 128>}, {pipeline_mode = #tpu.pipeline_mode<synchronous>, transform_indices = @transform_8, window_bounds = array<i64: 32, 128>}, {pipeline_mode = #tpu.pipeline_mode<synchronous>, transform_indices = @transform_9, window_bounds = array<i64: 4, 128, 128>}, {pipeline_mode = #tpu.pipeline_mode<synchronous>, transform_indices = @transform_10, window_bounds = array<i64: 128, 128>}, {pipeline_mode = #tpu.pipeline_mode<synchronous>, transform_indices = @transform_11, window_bounds = array<i64: 9, 128>}, {pipeline_mode = #tpu.pipeline_mode<synchronous>, transform_indices = @transform_12, window_bounds = array<i64: 1, 128>}, {transform_indices = @transform_13, window_bounds = array<i64: 8, 128>}, {transform_indices = @transform_14, window_bounds = array<i64: 8, 128>}]} {
    %c0 = arith.constant 0 : index
    %c0_0 = arith.constant 0 : index
    %0 = vector.load %arg5[%c0, %c0_0] : memref<256x256xbf16, #tpu.memory_space<vmem>>, vector<256x256xbf16>
    %c0_1 = arith.constant 0 : index
    %c0_2 = arith.constant 0 : index
    %1 = vector.load %arg1[%c0_1, %c0_2] : memref<8x32xf32, #tpu.memory_space<vmem>>, vector<8x32xf32>
    %2 = arith.truncf %1 : vector<8x32xf32> to vector<8x32xbf16>
    %c0_3 = arith.constant 0 : index
    %c0_4 = arith.constant 0 : index
    %3 = vector.load %arg6[%c0_3, %c0_4] : memref<4x128xf32, #tpu.memory_space<vmem>>, vector<1x128xf32>
    %c1 = arith.constant 1 : index
    %c0_5 = arith.constant 0 : index
    %4 = vector.load %arg6[%c1, %c0_5] : memref<4x128xf32, #tpu.memory_space<vmem>>, vector<1x128xf32>
    %c2 = arith.constant 2 : index
    %c0_6 = arith.constant 0 : index
    %5 = vector.load %arg6[%c2, %c0_6] : memref<4x128xf32, #tpu.memory_space<vmem>>, vector<1x128xf32>
    %c3 = arith.constant 3 : index
    %c0_7 = arith.constant 0 : index
    %6 = vector.load %arg6[%c3, %c0_7] : memref<4x128xf32, #tpu.memory_space<vmem>>, vector<1x128xf32>
    %c0_8 = arith.constant 0 : index
    %c0_9 = arith.constant 0 : index
    %7 = vector.load %arg2[%c0_8, %c0_9] : memref<32x256xbf16, #tpu.memory_space<vmem>>, vector<32x256xbf16>
    %cst = arith.constant dense<0.000000e+00> : vector<8x256xf32>
    %8 = tpu.matmul %2, %7, %cst {dimension_numbers = #tpu.dot_dimension_numbers<[1], [0], [0], [1], [0, 0, 1, 1], [], []>} : vector<8x32xbf16>, vector<32x256xbf16>, vector<8x256xf32> -> vector<8x256xf32>
    %9 = vector.extract_strided_slice %8 {offsets = [0, 0], sizes = [8, 128], strides = [1, 1]} : vector<8x256xf32> to vector<8x128xf32>
    %10 = vector.extract_strided_slice %8 {offsets = [0, 128], sizes = [8, 128], strides = [1, 1]} : vector<8x256xf32> to vector<8x128xf32>
    %11 = arith.mulf %9, %9 : vector<8x128xf32>
    %12 = tpu.concatenate %9, %11 in 1 : vector<8x128xf32>, vector<8x128xf32> -> vector<8x256xf32>
    %13 = arith.truncf %12 : vector<8x256xf32> to vector<8x256xbf16>
    %cst_10 = arith.constant dense<0.000000e+00> : vector<8x256xf32>
    %14 = tpu.matmul %13, %0, %cst_10 {dimension_numbers = #tpu.dot_dimension_numbers<[1], [0], [0], [1], [0, 0, 1, 1], [], []>} : vector<8x256xbf16>, vector<256x256xbf16>, vector<8x256xf32> -> vector<8x256xf32>
    %15 = vector.extract_strided_slice %14 {offsets = [0, 0], sizes = [8, 128], strides = [1, 1]} : vector<8x256xf32> to vector<8x128xf32>
    %16 = vector.extract_strided_slice %14 {offsets = [0, 128], sizes = [8, 128], strides = [1, 1]} : vector<8x256xf32> to vector<8x128xf32>
    %17 = arith.mulf %15, %15 : vector<8x128xf32>
    %18 = arith.subf %16, %17 : vector<8x128xf32>
    %cst_11 = arith.constant 0.000000e+00 : f32
    %19 = vector.broadcast %cst_11 : f32 to vector<8x128xf32>
    %20 = arith.maximumf %18, %19 : vector<8x128xf32>
    %21 = arith.subf %9, %15 : vector<8x128xf32>
    %cst_12 = arith.constant 9.99999974E-6 : f32
    %22 = vector.broadcast %cst_12 : f32 to vector<8x128xf32>
    %23 = arith.addf %20, %22 : vector<8x128xf32>
    %24 = math.rsqrt %23 : vector<8x128xf32>
    %25 = arith.mulf %21, %24 : vector<8x128xf32>
    %26 = vector.broadcast %3 : vector<1x128xf32> to vector<8x128xf32>
    %27 = arith.mulf %25, %26 : vector<8x128xf32>
    %28 = vector.broadcast %4 : vector<1x128xf32> to vector<8x128xf32>
    %29 = arith.addf %27, %28 : vector<8x128xf32>
    %cst_13 = arith.constant 0.000000e+00 : f32
    %30 = vector.broadcast %cst_13 : f32 to vector<8x128xf32>
    %31 = arith.maximumf %29, %30 : vector<8x128xf32>
    %32 = arith.truncf %31 : vector<8x128xf32> to vector<8x128xbf16>
    %c0_14 = arith.constant 0 : index
    %c0_15 = arith.constant 0 : index
    %33 = vector.load %arg3[%c0_14, %c0_15] : memref<128x128xbf16, #tpu.memory_space<vmem>>, vector<128x128xbf16>
    %cst_16 = arith.constant dense<0.000000e+00> : vector<8x128xf32>
    %34 = tpu.matmul %32, %33, %cst_16 {dimension_numbers = #tpu.dot_dimension_numbers<[1], [0], [0], [1], [0, 0, 1, 1], [], []>} : vector<8x128xbf16>, vector<128x128xbf16>, vector<8x128xf32> -> vector<8x128xf32>
    %35 = arith.mulf %34, %34 : vector<8x128xf32>
    %36 = tpu.concatenate %34, %35 in 1 : vector<8x128xf32>, vector<8x128xf32> -> vector<8x256xf32>
    %37 = arith.truncf %36 : vector<8x256xf32> to vector<8x256xbf16>
    %cst_17 = arith.constant dense<0.000000e+00> : vector<8x256xf32>
    %38 = tpu.matmul %37, %0, %cst_17 {dimension_numbers = #tpu.dot_dimension_numbers<[1], [0], [0], [1], [0, 0, 1, 1], [], []>} : vector<8x256xbf16>, vector<256x256xbf16>, vector<8x256xf32> -> vector<8x256xf32>
    %39 = vector.extract_strided_slice %38 {offsets = [0, 0], sizes = [8, 128], strides = [1, 1]} : vector<8x256xf32> to vector<8x128xf32>
    %40 = vector.extract_strided_slice %38 {offsets = [0, 128], sizes = [8, 128], strides = [1, 1]} : vector<8x256xf32> to vector<8x128xf32>
    %41 = arith.mulf %39, %39 : vector<8x128xf32>
    %42 = arith.subf %40, %41 : vector<8x128xf32>
    %cst_18 = arith.constant 0.000000e+00 : f32
    %43 = vector.broadcast %cst_18 : f32 to vector<8x128xf32>
    %44 = arith.maximumf %42, %43 : vector<8x128xf32>
    %45 = arith.subf %34, %39 : vector<8x128xf32>
    %cst_19 = arith.constant 9.99999974E-6 : f32
    %46 = vector.broadcast %cst_19 : f32 to vector<8x128xf32>
    %47 = arith.addf %44, %46 : vector<8x128xf32>
    %48 = math.rsqrt %47 : vector<8x128xf32>
    %49 = arith.mulf %45, %48 : vector<8x128xf32>
    %50 = vector.broadcast %5 : vector<1x128xf32> to vector<8x128xf32>
    %51 = arith.mulf %49, %50 : vector<8x128xf32>
    %52 = vector.broadcast %6 : vector<1x128xf32> to vector<8x128xf32>
    %53 = arith.addf %51, %52 : vector<8x128xf32>
    %54 = arith.addf %53, %10 : vector<8x128xf32>
    %cst_20 = arith.constant 0.000000e+00 : f32
    %55 = vector.broadcast %cst_20 : f32 to vector<8x128xf32>
    %56 = arith.maximumf %54, %55 : vector<8x128xf32>
    %57 = arith.truncf %56 : vector<8x128xf32> to vector<8x128xbf16>
    %c0_21 = arith.constant 0 : index
    %c0_22 = arith.constant 0 : index
    %58 = vector.load %arg4[%c0_21, %c0_22] : memref<128x128xbf16, #tpu.memory_space<vmem>>, vector<128x128xbf16>
    %cst_23 = arith.constant dense<0.000000e+00> : vector<8x128xf32>
    %59 = tpu.matmul %57, %58, %cst_23 {dimension_numbers = #tpu.dot_dimension_numbers<[1], [0], [0], [1], [0, 0, 1, 1], [], []>} : vector<8x128xbf16>, vector<128x128xbf16>, vector<8x128xf32> -> vector<8x128xf32>
    %c0_24 = arith.constant 0 : index
    %c0_25 = arith.constant 0 : index
    %60 = vector.load %arg7[%c0_24, %c0_25] : memref<1x128xf32, #tpu.memory_space<vmem>>, vector<1x128xf32>
    %61 = vector.broadcast %60 : vector<1x128xf32> to vector<8x128xf32>
    %62 = arith.addf %59, %61 : vector<8x128xf32>
    %c0_26 = arith.constant 0 : index
    %c0_27 = arith.constant 0 : index
    %63 = vector.load %arg14[%c0_26, %c0_27] : memref<8x128xf32, #tpu.memory_space<vmem>>, vector<8x128xf32>
    tpu.vector_store %arg14[%c0_26, %c0_27], %62 {strides = array<i32>} : memref<8x128xf32, #tpu.memory_space<vmem>>, vector<8x128xf32>,
    %c0_28 = arith.constant 0 : index
    %c0_29 = arith.constant 0 : index
    %64 = vector.load %arg12[%c0_28, %c0_29] : memref<9x128xf32, #tpu.memory_space<vmem>>, vector<1x128xf32>
    %c1_30 = arith.constant 1 : index
    %c0_31 = arith.constant 0 : index
    %65 = vector.load %arg12[%c1_30, %c0_31] : memref<9x128xf32, #tpu.memory_space<vmem>>, vector<1x128xf32>
    %c2_32 = arith.constant 2 : index
    %c0_33 = arith.constant 0 : index
    %66 = vector.load %arg12[%c2_32, %c0_33] : memref<9x128xf32, #tpu.memory_space<vmem>>, vector<1x128xf32>
    %c3_34 = arith.constant 3 : index
    %c0_35 = arith.constant 0 : index
    %67 = vector.load %arg12[%c3_34, %c0_35] : memref<9x128xf32, #tpu.memory_space<vmem>>, vector<1x128xf32>
    %c4 = arith.constant 4 : index
    %c0_36 = arith.constant 0 : index
    %68 = vector.load %arg12[%c4, %c0_36] : memref<9x128xf32, #tpu.memory_space<vmem>>, vector<1x128xf32>
    %c5 = arith.constant 5 : index
    %c0_37 = arith.constant 0 : index
    %69 = vector.load %arg12[%c5, %c0_37] : memref<9x128xf32, #tpu.memory_space<vmem>>, vector<1x128xf32>
    %c6 = arith.constant 6 : index
    %c0_38 = arith.constant 0 : index
    %70 = vector.load %arg12[%c6, %c0_38] : memref<9x128xf32, #tpu.memory_space<vmem>>, vector<1x128xf32>
    %c7 = arith.constant 7 : index
    %c0_39 = arith.constant 0 : index
    %71 = vector.load %arg12[%c7, %c0_39] : memref<9x128xf32, #tpu.memory_space<vmem>>, vector<1x128xf32>
    %c8 = arith.constant 8 : index
    %c0_40 = arith.constant 0 : index
    %72 = vector.load %arg12[%c8, %c0_40] : memref<9x128xf32, #tpu.memory_space<vmem>>, vector<1x128xf32>
    %73 = arith.truncf %62 : vector<8x128xf32> to vector<8x128xbf16>
    %c0_41 = arith.constant 0 : index
    %c0_42 = arith.constant 0 : index
    %74 = vector.load %arg8[%c0_41, %c0_42] : memref<128x128xbf16, #tpu.memory_space<vmem>>, vector<128x128xbf16>
    %cst_43 = arith.constant dense<0.000000e+00> : vector<8x128xf32>
    %75 = tpu.matmul %73, %74, %cst_43 {dimension_numbers = #tpu.dot_dimension_numbers<[1], [0], [0], [1], [0, 0, 1, 1], [], []>} : vector<8x128xbf16>, vector<128x128xbf16>, vector<8x128xf32> -> vector<8x128xf32>
    %76 = vector.broadcast %64 : vector<1x128xf32> to vector<8x128xf32>
    %77 = arith.addf %75, %76 : vector<8x128xf32>
    %cst_44 = arith.constant 0.000000e+00 : f32
    %78 = vector.broadcast %cst_44 : f32 to vector<8x128xf32>
    %79 = arith.maximumf %77, %78 : vector<8x128xf32>
    %80 = arith.truncf %79 : vector<8x128xf32> to vector<8x128xbf16>
    %c0_45 = arith.constant 0 : index
    %c0_46 = arith.constant 0 : index
    %c0_47 = arith.constant 0 : index
    %81 = vector.load %arg10[%c0_45, %c0_46, %c0_47] : memref<4x128x128xbf16, #tpu.memory_space<vmem>>, vector<1x128x128xbf16>
    %82 = vector.shape_cast %81 : vector<1x128x128xbf16> to vector<128x128xbf16>
    %cst_48 = arith.constant dense<0.000000e+00> : vector<8x128xf32>
    %83 = tpu.matmul %80, %82, %cst_48 {dimension_numbers = #tpu.dot_dimension_numbers<[1], [0], [0], [1], [0, 0, 1, 1], [], []>} : vector<8x128xbf16>, vector<128x128xbf16>, vector<8x128xf32> -> vector<8x128xf32>
    %84 = arith.mulf %83, %83 : vector<8x128xf32>
    %85 = tpu.concatenate %83, %84 in 1 : vector<8x128xf32>, vector<8x128xf32> -> vector<8x256xf32>
    %86 = arith.truncf %85 : vector<8x256xf32> to vector<8x256xbf16>
    %cst_49 = arith.constant dense<0.000000e+00> : vector<8x256xf32>
    %87 = tpu.matmul %86, %0, %cst_49 {dimension_numbers = #tpu.dot_dimension_numbers<[1], [0], [0], [1], [0, 0, 1, 1], [], []>} : vector<8x256xbf16>, vector<256x256xbf16>, vector<8x256xf32> -> vector<8x256xf32>
    %88 = vector.extract_strided_slice %87 {offsets = [0, 0], sizes = [8, 128], strides = [1, 1]} : vector<8x256xf32> to vector<8x128xf32>
    %89 = vector.extract_strided_slice %87 {offsets = [0, 128], sizes = [8, 128], strides = [1, 1]} : vector<8x256xf32> to vector<8x128xf32>
    %90 = arith.mulf %88, %88 : vector<8x128xf32>
    %91 = arith.subf %89, %90 : vector<8x128xf32>
    %cst_50 = arith.constant 0.000000e+00 : f32
    %92 = vector.broadcast %cst_50 : f32 to vector<8x128xf32>
    %93 = arith.maximumf %91, %92 : vector<8x128xf32>
    %94 = arith.subf %83, %88 : vector<8x128xf32>
    %cst_51 = arith.constant 9.99999974E-6 : f32
    %95 = vector.broadcast %cst_51 : f32 to vector<8x128xf32>
    %96 = arith.addf %93, %95 : vector<8x128xf32>
    %97 = math.rsqrt %96 : vector<8x128xf32>
    %98 = arith.mulf %94, %97 : vector<8x128xf32>
    %99 = vector.broadcast %65 : vector<1x128xf32> to vector<8x128xf32>
    %100 = arith.mulf %98, %99 : vector<8x128xf32>
    %101 = vector.broadcast %66 : vector<1x128xf32> to vector<8x128xf32>
    %102 = arith.addf %100, %101 : vector<8x128xf32>
    %cst_52 = arith.constant 0.000000e+00 : f32
    %103 = vector.broadcast %cst_52 : f32 to vector<8x128xf32>
    %104 = arith.maximumf %102, %103 : vector<8x128xf32>
    %105 = arith.truncf %104 : vector<8x128xf32> to vector<8x128xbf16>
    %c1_53 = arith.constant 1 : index
    %c0_54 = arith.constant 0 : index
    %c0_55 = arith.constant 0 : index
    %106 = vector.load %arg10[%c1_53, %c0_54, %c0_55] : memref<4x128x128xbf16, #tpu.memory_space<vmem>>, vector<1x128x128xbf16>
    %107 = vector.shape_cast %106 : vector<1x128x128xbf16> to vector<128x128xbf16>
    %cst_56 = arith.constant dense<0.000000e+00> : vector<8x128xf32>
    %108 = tpu.matmul %105, %107, %cst_56 {dimension_numbers = #tpu.dot_dimension_numbers<[1], [0], [0], [1], [0, 0, 1, 1], [], []>} : vector<8x128xbf16>, vector<128x128xbf16>, vector<8x128xf32> -> vector<8x128xf32>
    %c0_57 = arith.constant 0 : index
    %c0_58 = arith.constant 0 : index
    %109 = vector.load %arg9[%c0_57, %c0_58] : memref<32x128xbf16, #tpu.memory_space<vmem>>, vector<32x128xbf16>
    %cst_59 = arith.constant dense<0.000000e+00> : vector<8x128xf32>
    %110 = tpu.matmul %2, %109, %cst_59 {dimension_numbers = #tpu.dot_dimension_numbers<[1], [0], [0], [1], [0, 0, 1, 1], [], []>} : vector<8x32xbf16>, vector<32x128xbf16>, vector<8x128xf32> -> vector<8x128xf32>
    %111 = arith.addf %108, %110 : vector<8x128xf32>
    %112 = arith.mulf %111, %111 : vector<8x128xf32>
    %113 = tpu.concatenate %111, %112 in 1 : vector<8x128xf32>, vector<8x128xf32> -> vector<8x256xf32>
    %114 = arith.truncf %113 : vector<8x256xf32> to vector<8x256xbf16>
    %cst_60 = arith.constant dense<0.000000e+00> : vector<8x256xf32>
    %115 = tpu.matmul %114, %0, %cst_60 {dimension_numbers = #tpu.dot_dimension_numbers<[1], [0], [0], [1], [0, 0, 1, 1], [], []>} : vector<8x256xbf16>, vector<256x256xbf16>, vector<8x256xf32> -> vector<8x256xf32>
    %116 = vector.extract_strided_slice %115 {offsets = [0, 0], sizes = [8, 128], strides = [1, 1]} : vector<8x256xf32> to vector<8x128xf32>
    %117 = vector.extract_strided_slice %115 {offsets = [0, 128], sizes = [8, 128], strides = [1, 1]} : vector<8x256xf32> to vector<8x128xf32>
    %118 = arith.mulf %116, %116 : vector<8x128xf32>
    %119 = arith.subf %117, %118 : vector<8x128xf32>
    %cst_61 = arith.constant 0.000000e+00 : f32
    %120 = vector.broadcast %cst_61 : f32 to vector<8x128xf32>
    %121 = arith.maximumf %119, %120 : vector<8x128xf32>
    %122 = arith.subf %111, %116 : vector<8x128xf32>
    %cst_62 = arith.constant 9.99999974E-6 : f32
    %123 = vector.broadcast %cst_62 : f32 to vector<8x128xf32>
    %124 = arith.addf %121, %123 : vector<8x128xf32>
    %125 = math.rsqrt %124 : vector<8x128xf32>
    %126 = arith.mulf %122, %125 : vector<8x128xf32>
    %127 = vector.broadcast %67 : vector<1x128xf32> to vector<8x128xf32>
    %128 = arith.mulf %126, %127 : vector<8x128xf32>
    %129 = vector.broadcast %68 : vector<1x128xf32> to vector<8x128xf32>
    %130 = arith.addf %128, %129 : vector<8x128xf32>
    %cst_63 = arith.constant 0.000000e+00 : f32
    %131 = vector.broadcast %cst_63 : f32 to vector<8x128xf32>
    %132 = arith.maximumf %130, %131 : vector<8x128xf32>
    %133 = arith.truncf %132 : vector<8x128xf32> to vector<8x128xbf16>
    %c2_64 = arith.constant 2 : index
    %c0_65 = arith.constant 0 : index
    %c0_66 = arith.constant 0 : index
    %134 = vector.load %arg10[%c2_64, %c0_65, %c0_66] : memref<4x128x128xbf16, #tpu.memory_space<vmem>>, vector<1x128x128xbf16>
    %135 = vector.shape_cast %134 : vector<1x128x128xbf16> to vector<128x128xbf16>
    %cst_67 = arith.constant dense<0.000000e+00> : vector<8x128xf32>
    %136 = tpu.matmul %133, %135, %cst_67 {dimension_numbers = #tpu.dot_dimension_numbers<[1], [0], [0], [1], [0, 0, 1, 1], [], []>} : vector<8x128xbf16>, vector<128x128xbf16>, vector<8x128xf32> -> vector<8x128xf32>
    %137 = arith.mulf %136, %136 : vector<8x128xf32>
    %138 = tpu.concatenate %136, %137 in 1 : vector<8x128xf32>, vector<8x128xf32> -> vector<8x256xf32>
    %139 = arith.truncf %138 : vector<8x256xf32> to vector<8x256xbf16>
    %cst_68 = arith.constant dense<0.000000e+00> : vector<8x256xf32>
    %140 = tpu.matmul %139, %0, %cst_68 {dimension_numbers = #tpu.dot_dimension_numbers<[1], [0], [0], [1], [0, 0, 1, 1], [], []>} : vector<8x256xbf16>, vector<256x256xbf16>, vector<8x256xf32> -> vector<8x256xf32>
    %141 = vector.extract_strided_slice %140 {offsets = [0, 0], sizes = [8, 128], strides = [1, 1]} : vector<8x256xf32> to vector<8x128xf32>
    %142 = vector.extract_strided_slice %140 {offsets = [0, 128], sizes = [8, 128], strides = [1, 1]} : vector<8x256xf32> to vector<8x128xf32>
    %143 = arith.mulf %141, %141 : vector<8x128xf32>
    %144 = arith.subf %142, %143 : vector<8x128xf32>
    %cst_69 = arith.constant 0.000000e+00 : f32
    %145 = vector.broadcast %cst_69 : f32 to vector<8x128xf32>
    %146 = arith.maximumf %144, %145 : vector<8x128xf32>
    %147 = arith.subf %136, %141 : vector<8x128xf32>
    %cst_70 = arith.constant 9.99999974E-6 : f32
    %148 = vector.broadcast %cst_70 : f32 to vector<8x128xf32>
    %149 = arith.addf %146, %148 : vector<8x128xf32>
    %150 = math.rsqrt %149 : vector<8x128xf32>
    %151 = arith.mulf %147, %150 : vector<8x128xf32>
    %152 = vector.broadcast %69 : vector<1x128xf32> to vector<8x128xf32>
    %153 = arith.mulf %151, %152 : vector<8x128xf32>
    %154 = vector.broadcast %70 : vector<1x128xf32> to vector<8x128xf32>
    %155 = arith.addf %153, %154 : vector<8x128xf32>
    %cst_71 = arith.constant 0.000000e+00 : f32
    %156 = vector.broadcast %cst_71 : f32 to vector<8x128xf32>
    %157 = arith.maximumf %155, %156 : vector<8x128xf32>
    %158 = arith.truncf %157 : vector<8x128xf32> to vector<8x128xbf16>
    %c3_72 = arith.constant 3 : index
    %c0_73 = arith.constant 0 : index
    %c0_74 = arith.constant 0 : index
    %159 = vector.load %arg10[%c3_72, %c0_73, %c0_74] : memref<4x128x128xbf16, #tpu.memory_space<vmem>>, vector<1x128x128xbf16>
    %160 = vector.shape_cast %159 : vector<1x128x128xbf16> to vector<128x128xbf16>
    %cst_75 = arith.constant dense<0.000000e+00> : vector<8x128xf32>
    %161 = tpu.matmul %158, %160, %cst_75 {dimension_numbers = #tpu.dot_dimension_numbers<[1], [0], [0], [1], [0, 0, 1, 1], [], []>} : vector<8x128xbf16>, vector<128x128xbf16>, vector<8x128xf32> -> vector<8x128xf32>
    %162 = arith.mulf %161, %161 : vector<8x128xf32>
    %163 = tpu.concatenate %161, %162 in 1 : vector<8x128xf32>, vector<8x128xf32> -> vector<8x256xf32>
    %164 = arith.truncf %163 : vector<8x256xf32> to vector<8x256xbf16>
    %cst_76 = arith.constant dense<0.000000e+00> : vector<8x256xf32>
    %165 = tpu.matmul %164, %0, %cst_76 {dimension_numbers = #tpu.dot_dimension_numbers<[1], [0], [0], [1], [0, 0, 1, 1], [], []>} : vector<8x256xbf16>, vector<256x256xbf16>, vector<8x256xf32> -> vector<8x256xf32>
    %166 = vector.extract_strided_slice %165 {offsets = [0, 0], sizes = [8, 128], strides = [1, 1]} : vector<8x256xf32> to vector<8x128xf32>
    %167 = vector.extract_strided_slice %165 {offsets = [0, 128], sizes = [8, 128], strides = [1, 1]} : vector<8x256xf32> to vector<8x128xf32>
    %168 = arith.mulf %166, %166 : vector<8x128xf32>
    %169 = arith.subf %167, %168 : vector<8x128xf32>
    %cst_77 = arith.constant 0.000000e+00 : f32
    %170 = vector.broadcast %cst_77 : f32 to vector<8x128xf32>
    %171 = arith.maximumf %169, %170 : vector<8x128xf32>
    %172 = arith.subf %161, %166 : vector<8x128xf32>
    %cst_78 = arith.constant 9.99999974E-6 : f32
    %173 = vector.broadcast %cst_78 : f32 to vector<8x128xf32>
    %174 = arith.addf %171, %173 : vector<8x128xf32>
    %175 = math.rsqrt %174 : vector<8x128xf32>
    %176 = arith.mulf %172, %175 : vector<8x128xf32>
    %177 = vector.broadcast %71 : vector<1x128xf32> to vector<8x128xf32>
    %178 = arith.mulf %176, %177 : vector<8x128xf32>
    %179 = vector.broadcast %72 : vector<1x128xf32> to vector<8x128xf32>
    %180 = arith.addf %178, %179 : vector<8x128xf32>
    %181 = arith.addf %180, %132 : vector<8x128xf32>
    %cst_79 = arith.constant 0.000000e+00 : f32
    %182 = vector.broadcast %cst_79 : f32 to vector<8x128xf32>
    %183 = arith.maximumf %181, %182 : vector<8x128xf32>
    %184 = arith.truncf %183 : vector<8x128xf32> to vector<8x128xbf16>
    %c0_80 = arith.constant 0 : index
    %c0_81 = arith.constant 0 : index
    %185 = vector.load %arg11[%c0_80, %c0_81] : memref<128x128xbf16, #tpu.memory_space<vmem>>, vector<128x128xbf16>
    %cst_82 = arith.constant dense<0.000000e+00> : vector<8x128xf32>
    %186 = tpu.matmul %184, %185, %cst_82 {dimension_numbers = #tpu.dot_dimension_numbers<[1], [0], [0], [1], [0, 0, 1, 1], [], []>} : vector<8x128xbf16>, vector<128x128xbf16>, vector<8x128xf32> -> vector<8x128xf32>
    %c0_83 = arith.constant 0 : index
    %c0_84 = arith.constant 0 : index
    %187 = vector.load %arg13[%c0_83, %c0_84] : memref<1x128xf32, #tpu.memory_space<vmem>>, vector<1x128xf32>
    %188 = vector.broadcast %187 : vector<1x128xf32> to vector<8x128xf32>
    %189 = arith.addf %186, %188 : vector<8x128xf32>
    %c0_85 = arith.constant 0 : index
    %c0_86 = arith.constant 0 : index
    %190 = vector.load %arg15[%c0_85, %c0_86] : memref<8x128xf32, #tpu.memory_space<vmem>>, vector<8x128xf32>
    tpu.vector_store %arg15[%c0_85, %c0_86], %189 {strides = array<i32>} : memref<8x128xf32, #tpu.memory_space<vmem>>, vector<8x128xf32>,
    return
  }
  func.func @transform_0(%arg0: i32) -> (i32, i32) {
    %c0_i32 = arith.constant 0 : i32
    %c0_i32_0 = arith.constant 0 : i32
    return %arg0, %c0_i32 : i32, i32
  }
  func.func @transform_1(%arg0: i32) -> (i32, i32) {
    %c0_i32 = arith.constant 0 : i32
    %c0_i32_0 = arith.constant 0 : i32
    %c0_i32_1 = arith.constant 0 : i32
    return %c0_i32, %c0_i32_0 : i32, i32
  }
  func.func @transform_2(%arg0: i32) -> (i32, i32) {
    %c0_i32 = arith.constant 0 : i32
    %c0_i32_0 = arith.constant 0 : i32
    %c0_i32_1 = arith.constant 0 : i32
    return %c0_i32, %c0_i32_0 : i32, i32
  }
  func.func @transform_3(%arg0: i32) -> (i32, i32) {
    %c0_i32 = arith.constant 0 : i32
    %c0_i32_0 = arith.constant 0 : i32
    %c0_i32_1 = arith.constant 0 : i32
    return %c0_i32, %c0_i32_0 : i32, i32
  }
  func.func @transform_4(%arg0: i32) -> (i32, i32) {
    %c0_i32 = arith.constant 0 : i32
    %c0_i32_0 = arith.constant 0 : i32
    %c0_i32_1 = arith.constant 0 : i32
    return %c0_i32, %c0_i32_0 : i32, i32
  }
  func.func @transform_5(%arg0: i32) -> (i32, i32) {
    %c0_i32 = arith.constant 0 : i32
    %c0_i32_0 = arith.constant 0 : i32
    %c0_i32_1 = arith.constant 0 : i32
    return %c0_i32, %c0_i32_0 : i32, i32
  }
  func.func @transform_6(%arg0: i32) -> (i32, i32) {
    %c0_i32 = arith.constant 0 : i32
    %c0_i32_0 = arith.constant 0 : i32
    %c0_i32_1 = arith.constant 0 : i32
    return %c0_i32, %c0_i32_0 : i32, i32
  }
  func.func @transform_7(%arg0: i32) -> (i32, i32) {
    %c0_i32 = arith.constant 0 : i32
    %c0_i32_0 = arith.constant 0 : i32
    %c0_i32_1 = arith.constant 0 : i32
    return %c0_i32, %c0_i32_0 : i32, i32
  }
  func.func @transform_8(%arg0: i32) -> (i32, i32) {
    %c0_i32 = arith.constant 0 : i32
    %c0_i32_0 = arith.constant 0 : i32
    %c0_i32_1 = arith.constant 0 : i32
    return %c0_i32, %c0_i32_0 : i32, i32
  }
  func.func @transform_9(%arg0: i32) -> (i32, i32, i32) {
    %c0_i32 = arith.constant 0 : i32
    %c0_i32_0 = arith.constant 0 : i32
    %c0_i32_1 = arith.constant 0 : i32
    %c0_i32_2 = arith.constant 0 : i32
    return %c0_i32, %c0_i32_0, %c0_i32_1 : i32, i32, i32
  }
  func.func @transform_10(%arg0: i32) -> (i32, i32) {
    %c0_i32 = arith.constant 0 : i32
    %c0_i32_0 = arith.constant 0 : i32
    %c0_i32_1 = arith.constant 0 : i32
    return %c0_i32, %c0_i32_0 : i32, i32
  }
  func.func @transform_11(%arg0: i32) -> (i32, i32) {
    %c0_i32 = arith.constant 0 : i32
    %c0_i32_0 = arith.constant 0 : i32
    %c0_i32_1 = arith.constant 0 : i32
    return %c0_i32, %c0_i32_0 : i32, i32
  }
  func.func @transform_12(%arg0: i32) -> (i32, i32) {
    %c0_i32 = arith.constant 0 : i32
    %c0_i32_0 = arith.constant 0 : i32
    %c0_i32_1 = arith.constant 0 : i32
    return %c0_i32, %c0_i32_0 : i32, i32
  }
  func.func @transform_13(%arg0: i32) -> (i32, i32) {
    %c0_i32 = arith.constant 0 : i32
    %c0_i32_0 = arith.constant 0 : i32
    return %arg0, %c0_i32 : i32, i32
  }
  func.func @transform_14(%arg0: i32) -> (i32, i32) {
    %c0_i32 = arith.constant 0 : i32
    %c0_i32_0 = arith.constant 0 : i32
    return %arg0, %c0_i32 : i32, i32
  }
}

</mosaic_0001>

<llo_original>
// kernel: tpu_custom_call.1
$region0: #{tpu_custom_call.1}
  #allocation0 [shape = 'u32[]', space=smem, size = 0x4, offset = 0x4, fixed_abs, tag = 'smem constant byte address 0x4 - core index']
  #allocation1 [shape = 'u32[72,128]{1,0:T(1,128)}', space=vmem, size = 0x9000, scoped, tag = 'internal scratch']
  %s0 = inlined_call_operand.hbm [shape: f32[8,32], index: 0, kind: input, shape index: {}]
  %s1 = inlined_call_operand.hbm [shape: bf16[32,256], index: 1, kind: input, shape index: {}]
  %s2 = inlined_call_operand.hbm [shape: bf16[128,128], index: 2, kind: input, shape index: {}]
  %s3 = inlined_call_operand.hbm [shape: bf16[128,128], index: 3, kind: input, shape index: {}]
  %s4 = inlined_call_operand.hbm [shape: bf16[256,256], index: 4, kind: input, shape index: {}]
  %s5 = inlined_call_operand.vmem [shape: f32[4,128], index: 5, kind: input, shape index: {}]
  %s6 = inlined_call_operand.vmem [shape: f32[1,128], index: 6, kind: input, shape index: {}]
  %s7 = inlined_call_operand.hbm [shape: bf16[128,128], index: 7, kind: input, shape index: {}]
  %s8 = inlined_call_operand.hbm [shape: bf16[32,128], index: 8, kind: input, shape index: {}]
  %s9 = inlined_call_operand.hbm [shape: bf16[4,128,128], index: 9, kind: input, shape index: {}]
  %s10 = inlined_call_operand.hbm [shape: bf16[128,128], index: 10, kind: input, shape index: {}]
  %s11 = inlined_call_operand.hbm [shape: f32[9,128], index: 11, kind: input, shape index: {}]
  %s12 = inlined_call_operand.vmem [shape: f32[1,128], index: 12, kind: input, shape index: {}]
  %s13 = inlined_call_operand.hbm [shape: f32[8,128], index: 13, kind: output, shape index: {0}]
  %s14 = inlined_call_operand.hbm [shape: f32[8,128], index: 14, kind: output, shape index: {1}]
  %15 = xla_tuple %s13, %s14
  %s16 = sld [smem:[#allocation0]]
  $region110: #{tpu_custom_call.1} parent=0
    _
  %s18 = ssub.s32 1, %s16
  %s19 = scalar_select 0, %s18, %s16
  $region1: #{tpu_custom_call.1} parent=0
    #allocation2 [shape = 'u8[4096]{0}', space=vmem, size = 0x1000, scoped, tag = 'input window, operand 0, single buffered']
    #allocation3 [shape = 's32[1]{0}', space=sflag, size = 0x4, scoped, tag = 'scoped memory for tpu_custom_call.1']
    #allocation4 [shape = 's32[1]{0}', space=sflag, size = 0x4, scoped, tag = 'scoped memory for tpu_custom_call.1']
    #allocation5 [shape = 'u8[16384]{0}', space=vmem, size = 0x4000, scoped, tag = 'input window, operand 1, single buffered']
    #allocation6 [shape = 's32[1]{0}', space=sflag, size = 0x4, scoped, tag = 'scoped memory for tpu_custom_call.1']
    #allocation7 [shape = 'u8[32768]{0}', space=vmem, size = 0x8000, scoped, tag = 'input window, operand 2, single buffered']
    #allocation8 [shape = 'u8[32768]{0}', space=vmem, size = 0x8000, scoped, tag = 'input window, operand 3, single buffered']
    #allocation9 [shape = 's32[1]{0}', space=sflag, size = 0x4, scoped, tag = 'scoped memory for tpu_custom_call.1']
    #allocation10 [shape = 'u8[131072]{0}', space=vmem, size = 0x20000, scoped, tag = 'input window, operand 4, single buffered']
    #allocation11 [shape = 'u8[32768]{0}', space=vmem, size = 0x8000, scoped, tag = 'input window, operand 7, single buffered']
    #allocation12 [shape = 's32[1]{0}', space=sflag, size = 0x4, scoped, tag = 'scoped memory for tpu_custom_call.1']
    #allocation13 [shape = 'u8[8192]{0}', space=vmem, size = 0x2000, scoped, tag = 'input window, operand 8, single buffered']
    #allocation14 [shape = 'u8[131072]{0}', space=vmem, size = 0x20000, scoped, tag = 'input window, operand 9, single buffered']
    #allocation15 [shape = 's32[1]{0}', space=sflag, size = 0x4, scoped, tag = 'scoped memory for tpu_custom_call.1']
    #allocation16 [shape = 'u8[32768]{0}', space=vmem, size = 0x8000, scoped, tag = 'input window, operand 10, single buffered']
    #allocation17 [shape = 'u8[8192]{0}', space=vmem, size = 0x2000, scoped, tag = 'input window, operand 11, single buffered']
    #allocation18 [shape = 's32[1]{0}', space=sflag, size = 0x4, scoped, tag = 'scoped memory for tpu_custom_call.1']
    #allocation19 [shape = 'u8[4096]{0}', space=vmem, size = 0x1000, scoped, tag = 'output window, operand 0, single buffered']
    #allocation20 [shape = 'u8[4096]{0}', space=vmem, size = 0x1000, scoped, tag = 'output window, operand 1, single buffered']
    #allocation21 [shape = 's32[1]{0}', space=sflag, size = 0x4, scoped, tag = 'scoped memory for tpu_custom_call.1']
    %20 = vsyncpa [#allocation3], 0
    %21 = vsyncpa [#allocation6], 0
    %22 = vsyncpa [#allocation9], 0
    %23 = vsyncpa [#allocation12], 0
    %24 = vsyncpa [#allocation15], 0
    %25 = vsyncpa [#allocation18], 0
    %26 = vsyncpa [#allocation4], 0
    %27 = vsyncpa [#allocation21], 0
    // Predicated region
    $region2: #{tpu_custom_call.1} parent=1 // pred_check
      _
    $region3: #{tpu_custom_call.1} parent=1 // pred_check_branch
      %29 = sbr.rel (0) target = $region5
    $region4: #{tpu_custom_call.1} parent=1 // pred_region
      %31 = vsyncadd [#allocation3], 0
      %s33 = sshll.u32 %s0, 4
      %s34 = int_to_ptr.hbm [resolvable:$true] %s33
      %s35 = sshll.u32 [#allocation2], 4
      %s36 = int_to_ptr.vmem [resolvable:$true] %s35
      %38 = dma.hbm_to_vmem [thread:$0]  %s34, 128, %s36, [#allocation3]
    $region5: #{tpu_custom_call.1} parent=1 // pred_fallthru
      _
    // Predicated region
    $region6: #{tpu_custom_call.1} parent=1 // pred_check
      _
    $region7: #{tpu_custom_call.1} parent=1 // pred_check_branch
      %40 = sbr.rel (0) target = $region9
    $region8: #{tpu_custom_call.1} parent=1 // pred_region
      %42 = vsyncadd [#allocation6], 0
      %s43 = sshll.u32 %s1, 4
      %s44 = int_to_ptr.hbm [resolvable:$true] %s43
      %s45 = sshll.u32 [#allocation5], 4
      %s46 = int_to_ptr.vmem [resolvable:$true] %s45
      %51 = dma.hbm_to_vmem [thread:$0]  %s44, 512, %s46, [#allocation6], 128, 128, 8
    $region9: #{tpu_custom_call.1} parent=1 // pred_fallthru
      _
    // Predicated region
    $region10: #{tpu_custom_call.1} parent=1 // pred_check
      _
    $region11: #{tpu_custom_call.1} parent=1 // pred_check_branch
      %53 = sbr.rel (0) target = $region13
    $region12: #{tpu_custom_call.1} parent=1 // pred_region
      %55 = vsyncadd [#allocation6], 0
      %s56 = sshll.u32 %s2, 4
      %s57 = int_to_ptr.hbm [resolvable:$true] %s56
      %s58 = sshll.u32 [#allocation7], 4
      %s59 = int_to_ptr.vmem [resolvable:$true] %s58
      %64 = dma.hbm_to_vmem [thread:$0]  %s57, 1024, %s59, [#allocation6], 64, 64, 4
    $region13: #{tpu_custom_call.1} parent=1 // pred_fallthru
      _
    // Predicated region
    $region14: #{tpu_custom_call.1} parent=1 // pred_check
      _
    $region15: #{tpu_custom_call.1} parent=1 // pred_check_branch
      %66 = sbr.rel (0) target = $region17
    $region16: #{tpu_custom_call.1} parent=1 // pred_region
      %68 = vsyncadd [#allocation9], 0
      %s69 = sshll.u32 %s3, 4
      %s70 = int_to_ptr.hbm [resolvable:$true] %s69
      %s71 = sshll.u32 [#allocation8], 4
      %s72 = int_to_ptr.vmem [resolvable:$true] %s71
      %77 = dma.hbm_to_vmem [thread:$0]  %s70, 1024, %s72, [#allocation9], 64, 64, 4
    $region17: #{tpu_custom_call.1} parent=1 // pred_fallthru
      _
    // Predicated region
    $region18: #{tpu_custom_call.1} parent=1 // pred_check
      _
    $region19: #{tpu_custom_call.1} parent=1 // pred_check_branch
      %79 = sbr.rel (0) target = $region21
    $region20: #{tpu_custom_call.1} parent=1 // pred_region
      %81 = vsyncadd [#allocation9], 0
      %s82 = sshll.u32 %s4, 4
      %s83 = int_to_ptr.hbm [resolvable:$true] %s82
      %s84 = sshll.u32 [#allocation10], 4
      %s85 = int_to_ptr.vmem [resolvable:$true] %s84
      %90 = dma.hbm_to_vmem [thread:$0]  %s83, 4096, %s85, [#allocation9], 128, 128, 8
    $region21: #{tpu_custom_call.1} parent=1 // pred_fallthru
      _
    // Predicated region
    $region22: #{tpu_custom_call.1} parent=1 // pred_check
      _
    $region23: #{tpu_custom_call.1} parent=1 // pred_check_branch
      %92 = sbr.rel (0) target = $region25
    $region24: #{tpu_custom_call.1} parent=1 // pred_region
      _
    $region25: #{tpu_custom_call.1} parent=1 // pred_fallthru
      _
    // Predicated region
    $region26: #{tpu_custom_call.1} parent=1 // pred_check
      _
    $region27: #{tpu_custom_call.1} parent=1 // pred_check_branch
      %94 = sbr.rel (0) target = $region29
    $region28: #{tpu_custom_call.1} parent=1 // pred_region
      _
    $region29: #{tpu_custom_call.1} parent=1 // pred_fallthru
      _
    // Predicated region
    $region30: #{tpu_custom_call.1} parent=1 // pred_check
      _
    $region31: #{tpu_custom_call.1} parent=1 // pred_check_branch
      %96 = sbr.rel (0) target = $region33
    $region32: #{tpu_custom_call.1} parent=1 // pred_region
      %98 = vsyncadd [#allocation12], 0
      %s99 = sshll.u32 %s7, 4
      %s100 = int_to_ptr.hbm [resolvable:$true] %s99
      %s101 = sshll.u32 [#allocation11], 4
      %s102 = int_to_ptr.vmem [resolvable:$true] %s101
      %107 = dma.hbm_to_vmem [thread:$0]  %s100, 1024, %s102, [#allocation12], 64, 64, 4
    $region33: #{tpu_custom_call.1} parent=1 // pred_fallthru
      _
    // Predicated region
    $region34: #{tpu_custom_call.1} parent=1 // pred_check
      _
    $region35: #{tpu_custom_call.1} parent=1 // pred_check_branch
      %109 = sbr.rel (0) target = $region37
    $region36: #{tpu_custom_call.1} parent=1 // pred_region
      %111 = vsyncadd [#allocation12], 0
      %s112 = sshll.u32 %s8, 4
      %s113 = int_to_ptr.hbm [resolvable:$true] %s112
      %s114 = sshll.u32 [#allocation13], 4
      %s115 = int_to_ptr.vmem [resolvable:$true] %s114
      %120 = dma.hbm_to_vmem [thread:$0]  %s113, 256, %s115, [#allocation12], 64, 64, 4
    $region37: #{tpu_custom_call.1} parent=1 // pred_fallthru
      _
    // Predicated region
    $region38: #{tpu_custom_call.1} parent=1 // pred_check
      _
    $region39: #{tpu_custom_call.1} parent=1 // pred_check_branch
      %122 = sbr.rel (0) target = $region41
    $region40: #{tpu_custom_call.1} parent=1 // pred_region
      %124 = vsyncadd [#allocation15], 0
      %s125 = sshll.u32 %s9, 4
      %s126 = int_to_ptr.hbm [resolvable:$true] %s125
      %s127 = sshll.u32 [#allocation14], 4
      %s128 = int_to_ptr.vmem [resolvable:$true] %s127
      %133 = dma.hbm_to_vmem [thread:$0]  %s126, 4096, %s128, [#allocation15], 64, 64, 4
    $region41: #{tpu_custom_call.1} parent=1 // pred_fallthru
      _
    // Predicated region
    $region42: #{tpu_custom_call.1} parent=1 // pred_check
      _
    $region43: #{tpu_custom_call.1} parent=1 // pred_check_branch
      %135 = sbr.rel (0) target = $region45
    $region44: #{tpu_custom_call.1} parent=1 // pred_region
      %137 = vsyncadd [#allocation15], 0
      %s138 = sshll.u32 %s10, 4
      %s139 = int_to_ptr.hbm [resolvable:$true] %s138
      %s140 = sshll.u32 [#allocation16], 4
      %s141 = int_to_ptr.vmem [resolvable:$true] %s140
      %146 = dma.hbm_to_vmem [thread:$0]  %s139, 1024, %s141, [#allocation15], 64, 64, 4
    $region45: #{tpu_custom_call.1} parent=1 // pred_fallthru
      _
    // Predicated region
    $region46: #{tpu_custom_call.1} parent=1 // pred_check
      _
    $region47: #{tpu_custom_call.1} parent=1 // pred_check_branch
      %148 = sbr.rel (0) target = $region49
    $region48: #{tpu_custom_call.1} parent=1 // pred_region
      %150 = vsyncadd [#allocation18], 0
      %s151 = sshll.u32 %s11, 4
      %s152 = int_to_ptr.hbm [resolvable:$true] %s151
      %s153 = sshll.u32 [#allocation17], 4
      %s154 = int_to_ptr.vmem [resolvable:$true] %s153
      %159 = dma.hbm_to_vmem [thread:$0]  %s152, 256, %s154, [#allocation18], 128, 128, 8
    $region49: #{tpu_custom_call.1} parent=1 // pred_fallthru
      _
    // Predicated region
    $region50: #{tpu_custom_call.1} parent=1 // pred_check
      _
    $region51: #{tpu_custom_call.1} parent=1 // pred_check_branch
      %161 = sbr.rel (0) target = $region53
    $region52: #{tpu_custom_call.1} parent=1 // pred_region
      _
    $region53: #{tpu_custom_call.1} parent=1 // pred_fallthru
      _
    // Predicated region
    $region54: #{tpu_custom_call.1} parent=1 // pred_check
      _
    $region55: #{tpu_custom_call.1} parent=1 // pred_check_branch
      %163 = sbr.rel (0) target = $region57
    $region56: #{tpu_custom_call.1} parent=1 // pred_region
      %165 = dma.done [#allocation3], 128
    $region57: #{tpu_custom_call.1} parent=1 // pred_fallthru
      _
    // Predicated region
    $region58: #{tpu_custom_call.1} parent=1 // pred_check
      _
    $region59: #{tpu_custom_call.1} parent=1 // pred_check_branch
      %167 = sbr.rel (0) target = $region61
    $region60: #{tpu_custom_call.1} parent=1 // pred_region
      %169 = dma.done [#allocation6], 512
    $region61: #{tpu_custom_call.1} parent=1 // pred_fallthru
      _
    // Predicated region
    $region62: #{tpu_custom_call.1} parent=1 // pred_check
      _
    $region63: #{tpu_custom_call.1} parent=1 // pred_check_branch
      %171 = sbr.rel (0) target = $region65
    $region64: #{tpu_custom_call.1} parent=1 // pred_region
      %173 = dma.done [#allocation6], 1024
    $region65: #{tpu_custom_call.1} parent=1 // pred_fallthru
      _
    // Predicated region
    $region66: #{tpu_custom_call.1} parent=1 // pred_check
      _
    $region67: #{tpu_custom_call.1} parent=1 // pred_check_branch
      %175 = sbr.rel (0) target = $region69
    $region68: #{tpu_custom_call.1} parent=1 // pred_region
      %177 = dma.done [#allocation9], 1024
    $region69: #{tpu_custom_call.1} parent=1 // pred_fallthru
      _
    // Predicated region
    $region70: #{tpu_custom_call.1} parent=1 // pred_check
      _
    $region71: #{tpu_custom_call.1} parent=1 // pred_check_branch
      %179 = sbr.rel (0) target = $region73
    $region72: #{tpu_custom_call.1} parent=1 // pred_region
      %181 = dma.done [#allocation9], 4096
    $region73: #{tpu_custom_call.1} parent=1 // pred_fallthru
      _
    // Predicated region
    $region74: #{tpu_custom_call.1} parent=1 // pred_check
      _
    $region75: #{tpu_custom_call.1} parent=1 // pred_check_branch
      %183 = sbr.rel (0) target = $region77
    $region76: #{tpu_custom_call.1} parent=1 // pred_region
      %185 = dma.done [#allocation12], 1024
    $region77: #{tpu_custom_call.1} parent=1 // pred_fallthru
      _
    // Predicated region
    $region78: #{tpu_custom_call.1} parent=1 // pred_check
      _
    $region79: #{tpu_custom_call.1} parent=1 // pred_check_branch
      %187 = sbr.rel (0) target = $region81
    $region80: #{tpu_custom_call.1} parent=1 // pred_region
      %189 = dma.done [#allocation12], 256
    $region81: #{tpu_custom_call.1} parent=1 // pred_fallthru
      _
    // Predicated region
    $region82: #{tpu_custom_call.1} parent=1 // pred_check
      _
    $region83: #{tpu_custom_call.1} parent=1 // pred_check_branch
      %191 = sbr.rel (0) target = $region85
    $region84: #{tpu_custom_call.1} parent=1 // pred_region
      %193 = dma.done [#allocation15], 4096
    $region85: #{tpu_custom_call.1} parent=1 // pred_fallthru
      _
    // Predicated region
    $region86: #{tpu_custom_call.1} parent=1 // pred_check
      _
    $region87: #{tpu_custom_call.1} parent=1 // pred_check_branch
      %195 = sbr.rel (0) target = $region89
    $region88: #{tpu_custom_call.1} parent=1 // pred_region
      %197 = dma.done [#allocation15], 1024
    $region89: #{tpu_custom_call.1} parent=1 // pred_fallthru
      _
    // Predicated region
    $region90: #{tpu_custom_call.1} parent=1 // pred_check
      _
    $region91: #{tpu_custom_call.1} parent=1 // pred_check_branch
      %199 = sbr.rel (0) target = $region93
    $region92: #{tpu_custom_call.1} parent=1 // pred_region
      %201 = dma.done [#allocation18], 256
    $region93: #{tpu_custom_call.1} parent=1 // pred_fallthru
      _
    %v203 = vld [vmem:[#allocation10] sm:$0xff]
    %v204 = vld [vmem:[#allocation10 + $0x8] sm:$0xff]
    %v205 = vld [vmem:[#allocation10 + $0x10] sm:$0xff]
    %v206 = vld [vmem:[#allocation10 + $0x18] sm:$0xff]
    %v207 = vld [vmem:[#allocation10 + $0x20] sm:$0xff]
    %v208 = vld [vmem:[#allocation10 + $0x28] sm:$0xff]
    %v209 = vld [vmem:[#allocation10 + $0x30] sm:$0xff]
    %v210 = vld [vmem:[#allocation10 + $0x38] sm:$0xff]
    %v211 = vld [vmem:[#allocation10 + $0x40] sm:$0xff]
    %v212 = vld [vmem:[#allocation10 + $0x48] sm:$0xff]
    %v213 = vld [vmem:[#allocation10 + $0x50] sm:$0xff]
    %v214 = vld [vmem:[#allocation10 + $0x58] sm:$0xff]
    %v215 = vld [vmem:[#allocation10 + $0x60] sm:$0xff]
    %v216 = vld [vmem:[#allocation10 + $0x68] sm:$0xff]
    %v217 = vld [vmem:[#allocation10 + $0x70] sm:$0xff]
    %v218 = vld [vmem:[#allocation10 + $0x78] sm:$0xff]
    %v219 = vld [vmem:[#allocation10 + $0x80] sm:$0xff]
    %v220 = vld [vmem:[#allocation10 + $0x88] sm:$0xff]
    %v221 = vld [vmem:[#allocation10 + $0x90] sm:$0xff]
    %v222 = vld [vmem:[#allocation10 + $0x98] sm:$0xff]
    %v223 = vld [vmem:[#allocation10 + $0xa0] sm:$0xff]
    %v224 = vld [vmem:[#allocation10 + $0xa8] sm:$0xff]
    %v225 = vld [vmem:[#allocation10 + $0xb0] sm:$0xff]
    %v226 = vld [vmem:[#allocation10 + $0xb8] sm:$0xff]
    %v227 = vld [vmem:[#allocation10 + $0xc0] sm:$0xff]
    %v228 = vld [vmem:[#allocation10 + $0xc8] sm:$0xff]
    %v229 = vld [vmem:[#allocation10 + $0xd0] sm:$0xff]
    %v230 = vld [vmem:[#allocation10 + $0xd8] sm:$0xff]
    %v231 = vld [vmem:[#allocation10 + $0xe0] sm:$0xff]
    %v232 = vld [vmem:[#allocation10 + $0xe8] sm:$0xff]
    %v233 = vld [vmem:[#allocation10 + $0xf0] sm:$0xff]
    %v234 = vld [vmem:[#allocation10 + $0xf8] sm:$0xff]
    %v235 = vld [vmem:[#allocation2] sm:$0xff]
    %v236 = vpack.c.bf16 %v235, %v235
    %v237 = vld [vmem:[%s5] sm:$0x1]
    %v238 = vld [vmem:[%s5 + $0x1] sm:$0x1]
    %v239 = vld [vmem:[%s5 + $0x2] sm:$0x1]
    %v240 = vld [vmem:[%s5 + $0x3] sm:$0x1]
    %v241 = vld [vmem:[#allocation5] sm:$0xff]
    %v242 = vld [vmem:[#allocation5 + $0x8] sm:$0xff]
    %v243 = vld [vmem:[#allocation5 + $0x10] sm:$0xff]
    %v244 = vld [vmem:[#allocation5 + $0x18] sm:$0xff]
    %v249 = vunpack.c.l.b16 %v241
    %v250 = vunpack.c.h.b16 %v241
    %v251 = vunpack.c.l.b16 %v242
    %v252 = vunpack.c.h.b16 %v242
    %v253 = vunpack.c.l.b16 %v243
    %v254 = vunpack.c.h.b16 %v243
    %v255 = vunpack.c.l.b16 %v244
    %v256 = vunpack.c.h.b16 %v244
    %v257 = vpack.c.b16 %v251, %v249
    %v258 = vpack.c.b16 %v252, %v250
    %v259 = vpack.c.b16 %v255, %v253
    %v260 = vpack.c.b16 %v256, %v254
    %vm265 = vcmask 261120
    %v267 = vsel %vm265, %v236, 0
    %269 = vmatpush.bf16.msra.mxu0 0
    %270 = vmatpush.bf16.msra.mxu0 0
    %271 = vmatpush.bf16.msra.mxu0 0
    %272 = vmatpush.bf16.msra.mxu0 0
    %273 = vmatpush.bf16.msra.mxu0 0
    %274 = vmatpush.bf16.msra.mxu0 0
    %275 = vmatpush.bf16.msra.mxu0 %v259
    %276 = vmatpush.bf16.msra.mxu0 %v257
    %277 = vmatmul.bf16.gmra.mxu0 %v267
    %v278 = vpop.f32.mrf.mxu0
    %v279 = vadd.f32 0.0, %v278
    %v280 = vpop.f32.mrf.mxu0
    %281 = vdwg.mxu0
    %282 = vmatpush.bf16.msra.mxu0 0
    %283 = vmatpush.bf16.msra.mxu0 0
    %284 = vmatpush.bf16.msra.mxu0 0
    %285 = vmatpush.bf16.msra.mxu0 0
    %286 = vmatpush.bf16.msra.mxu0 0
    %287 = vmatpush.bf16.msra.mxu0 0
    %288 = vmatpush.bf16.msra.mxu0 %v260
    %289 = vmatpush.bf16.msra.mxu0 %v258
    %290 = vmatmul.bf16.gmra.mxu0 %v267
    %v291 = vpop.f32.mrf.mxu0
    %v292 = vadd.f32 0.0, %v291
    %v293 = vpop.f32.mrf.mxu0
    %294 = vdwg.mxu0
    %v295 = vmul.f32 %v279, %v279
    %v296 = vpack.c.bf16 %v279, %v279
    %v297 = vpack.c.bf16 %v295, %v295
    %v330 = vunpack.c.l.b16 %v203
    %v331 = vunpack.c.h.b16 %v203
    %v332 = vunpack.c.l.b16 %v204
    %v333 = vunpack.c.h.b16 %v204
    %v334 = vunpack.c.l.b16 %v205
    %v335 = vunpack.c.h.b16 %v205
    %v336 = vunpack.c.l.b16 %v206
    %v337 = vunpack.c.h.b16 %v206
    %v338 = vunpack.c.l.b16 %v207
    %v339 = vunpack.c.h.b16 %v207
    %v340 = vunpack.c.l.b16 %v208
    %v341 = vunpack.c.h.b16 %v208
    %v342 = vunpack.c.l.b16 %v209
    %v343 = vunpack.c.h.b16 %v209
    %v344 = vunpack.c.l.b16 %v210
    %v345 = vunpack.c.h.b16 %v210
    %v346 = vunpack.c.l.b16 %v211
    %v347 = vunpack.c.h.b16 %v211
    %v348 = vunpack.c.l.b16 %v212
    %v349 = vunpack.c.h.b16 %v212
    %v350 = vunpack.c.l.b16 %v213
    %v351 = vunpack.c.h.b16 %v213
    %v352 = vunpack.c.l.b16 %v214
    %v353 = vunpack.c.h.b16 %v214
    %v354 = vunpack.c.l.b16 %v215
    %v355 = vunpack.c.h.b16 %v215
    %v356 = vunpack.c.l.b16 %v216
    %v357 = vunpack.c.h.b16 %v216
    %v358 = vunpack.c.l.b16 %v217
    %v359 = vunpack.c.h.b16 %v217
    %v360 = vunpack.c.l.b16 %v218
    %v361 = vunpack.c.h.b16 %v218
    %v362 = vunpack.c.l.b16 %v219
    %v363 = vunpack.c.h.b16 %v219
    %v364 = vunpack.c.l.b16 %v220
    %v365 = vunpack.c.h.b16 %v220
    %v366 = vunpack.c.l.b16 %v221
    %v367 = vunpack.c.h.b16 %v221
    %v368 = vunpack.c.l.b16 %v222
    %v369 = vunpack.c.h.b16 %v222
    %v370 = vunpack.c.l.b16 %v223
    %v371 = vunpack.c.h.b16 %v223
    %v372 = vunpack.c.l.b16 %v224
    %v373 = vunpack.c.h.b16 %v224
    %v374 = vunpack.c.l.b16 %v225
    %v375 = vunpack.c.h.b16 %v225
    %v376 = vunpack.c.l.b16 %v226
    %v377 = vunpack.c.h.b16 %v226
    %v378 = vunpack.c.l.b16 %v227
    %v379 = vunpack.c.h.b16 %v227
    %v380 = vunpack.c.l.b16 %v228
    %v381 = vunpack.c.h.b16 %v228
    %v382 = vunpack.c.l.b16 %v229
    %v383 = vunpack.c.h.b16 %v229
    %v384 = vunpack.c.l.b16 %v230
    %v385 = vunpack.c.h.b16 %v230
    %v386 = vunpack.c.l.b16 %v231
    %v387 = vunpack.c.h.b16 %v231
    %v388 = vunpack.c.l.b16 %v232
    %v389 = vunpack.c.h.b16 %v232
    %v390 = vunpack.c.l.b16 %v233
    %v391 = vunpack.c.h.b16 %v233
    %v392 = vunpack.c.l.b16 %v234
    %v393 = vunpack.c.h.b16 %v234
    %v394 = vpack.c.b16 %v332, %v330
    %v395 = vpack.c.b16 %v333, %v331
    %v396 = vpack.c.b16 %v336, %v334
    %v397 = vpack.c.b16 %v337, %v335
    %v398 = vpack.c.b16 %v340, %v338
    %v399 = vpack.c.b16 %v341, %v339
    %v400 = vpack.c.b16 %v344, %v342
    %v401 = vpack.c.b16 %v345, %v343
    %v402 = vpack.c.b16 %v348, %v346
    %v403 = vpack.c.b16 %v349, %v347
    %v404 = vpack.c.b16 %v352, %v350
    %v405 = vpack.c.b16 %v353, %v351
    %v406 = vpack.c.b16 %v356, %v354
    %v407 = vpack.c.b16 %v357, %v355
    %v408 = vpack.c.b16 %v360, %v358
    %v409 = vpack.c.b16 %v361, %v359
    %v410 = vpack.c.b16 %v364, %v362
    %v411 = vpack.c.b16 %v365, %v363
    %v412 = vpack.c.b16 %v368, %v366
    %v413 = vpack.c.b16 %v369, %v367
    %v414 = vpack.c.b16 %v372, %v370
    %v415 = vpack.c.b16 %v373, %v371
    %v416 = vpack.c.b16 %v376, %v374
    %v417 = vpack.c.b16 %v377, %v375
    %v418 = vpack.c.b16 %v380, %v378
    %v419 = vpack.c.b16 %v381, %v379
    %v420 = vpack.c.b16 %v384, %v382
    %v421 = vpack.c.b16 %v385, %v383
    %v422 = vpack.c.b16 %v388, %v386
    %v423 = vpack.c.b16 %v389, %v387
    %v424 = vpack.c.b16 %v392, %v390
    %v425 = vpack.c.b16 %v393, %v391
    %458 = vmatpush.bf16.msra.mxu0 %v408
    %459 = vmatpush.bf16.msra.mxu0 %v406
    %460 = vmatpush.bf16.msra.mxu0 %v404
    %461 = vmatpush.bf16.msra.mxu0 %v402
    %462 = vmatpush.bf16.msra.mxu0 %v400
    %463 = vmatpush.bf16.msra.mxu0 %v398
    %464 = vmatpush.bf16.msra.mxu0 %v396
    %465 = vmatpush.bf16.msra.mxu0 %v394
    %466 = vmatmul.bf16.gmra.mxu0 %v296
    %v467 = vpop.f32.mrf.mxu0
    %v468 = vadd.f32 0.0, %v467
    %v469 = vpop.f32.mrf.mxu0
    %470 = vdwg.mxu0
    %471 = vmatpush.bf16.msra.mxu0 %v424
    %472 = vmatpush.bf16.msra.mxu0 %v422
    %473 = vmatpush.bf16.msra.mxu0 %v420
    %474 = vmatpush.bf16.msra.mxu0 %v418
    %475 = vmatpush.bf16.msra.mxu0 %v416
    %476 = vmatpush.bf16.msra.mxu0 %v414
    %477 = vmatpush.bf16.msra.mxu0 %v412
    %478 = vmatpush.bf16.msra.mxu0 %v410
    %479 = vmatmul.bf16.gmra.mxu0 %v297
    %v480 = vpop.f32.mrf.mxu0
    %v481 = vadd.f32 %v468, %v480
    %v482 = vpop.f32.mrf.mxu0
    %483 = vdwg.mxu0
    %484 = vmatpush.bf16.msra.mxu0 %v409
    %485 = vmatpush.bf16.msra.mxu0 %v407
    %486 = vmatpush.bf16.msra.mxu0 %v405
    %487 = vmatpush.bf16.msra.mxu0 %v403
    %488 = vmatpush.bf16.msra.mxu0 %v401
    %489 = vmatpush.bf16.msra.mxu0 %v399
    %490 = vmatpush.bf16.msra.mxu0 %v397
    %491 = vmatpush.bf16.msra.mxu0 %v395
    %492 = vmatmul.bf16.gmra.mxu0 %v296
    %v493 = vpop.f32.mrf.mxu0
    %v494 = vadd.f32 0.0, %v493
    %v495 = vpop.f32.mrf.mxu0
    %496 = vdwg.mxu0
    %497 = vmatpush.bf16.msra.mxu0 %v425
    %498 = vmatpush.bf16.msra.mxu0 %v423
    %499 = vmatpush.bf16.msra.mxu0 %v421
    %500 = vmatpush.bf16.msra.mxu0 %v419
    %501 = vmatpush.bf16.msra.mxu0 %v417
    %502 = vmatpush.bf16.msra.mxu0 %v415
    %503 = vmatpush.bf16.msra.mxu0 %v413
    %504 = vmatpush.bf16.msra.mxu0 %v411
    %505 = vmatmul.bf16.gmra.mxu0 %v297
    %v506 = vpop.f32.mrf.mxu0
    %v507 = vadd.f32 %v494, %v506
    %v508 = vpop.f32.mrf.mxu0
    %509 = vdwg.mxu0
    %v510 = vmul.f32 %v481, %v481
    %v511 = vsub.f32 %v507, %v510
    %v512 = vmax.f32 %v511, 0.0
    %v513 = vsub.f32 %v279, %v481
    %v514 = vadd.f32 %v512, 1e-05
    %v515 = vrsqrt.pop %v514
    %v516 = vmul.f32 %v515, %v514
    %v517 = vmul.f32 %v516, %v515
    %v518 = vmul.f32 0.5, %v517
    %v519 = vsub.f32 1.5, %v518
    %v520 = vmul.f32 %v515, %v519
    %vm521 = vweird.f32 %v514
    %vm522 = vweird.f32 %v515
    %vm523 = vmor %vm521, %vm522
    %v524 = vsel %vm523, %v515, %v520
    %v525 = vmul.f32 %v513, %v524
    %v526 = vperm.slane %v237, 0
    %v527 = vmul.f32 %v525, %v526
    %v528 = vperm.slane %v238, 0
    %v529 = vadd.f32 %v527, %v528
    %v530 = vmax.f32 %v529, 0.0
    %v531 = vpack.c.bf16 %v530, %v530
    %v532 = vld [vmem:[#allocation7] sm:$0xf]
    %v533 = vld [vmem:[#allocation7 + $0x4] sm:$0xf]
    %v534 = vld [vmem:[#allocation7 + $0x8] sm:$0xf]
    %v535 = vld [vmem:[#allocation7 + $0xc] sm:$0xf]
    %v536 = vld [vmem:[#allocation7 + $0x10] sm:$0xf]
    %v537 = vld [vmem:[#allocation7 + $0x14] sm:$0xf]
    %v538 = vld [vmem:[#allocation7 + $0x18] sm:$0xf]
    %v539 = vld [vmem:[#allocation7 + $0x1c] sm:$0xf]
    %v540 = vld [vmem:[#allocation7 + $0x20] sm:$0xf]
    %v541 = vld [vmem:[#allocation7 + $0x24] sm:$0xf]
    %v542 = vld [vmem:[#allocation7 + $0x28] sm:$0xf]
    %v543 = vld [vmem:[#allocation7 + $0x2c] sm:$0xf]
    %v544 = vld [vmem:[#allocation7 + $0x30] sm:$0xf]
    %v545 = vld [vmem:[#allocation7 + $0x34] sm:$0xf]
    %v546 = vld [vmem:[#allocation7 + $0x38] sm:$0xf]
    %v547 = vld [vmem:[#allocation7 + $0x3c] sm:$0xf]
    %v564 = vunpack.c.l.b16 %v532
    %v565 = vunpack.c.l.b16 %v533
    %v566 = vunpack.c.l.b16 %v534
    %v567 = vunpack.c.l.b16 %v535
    %v568 = vunpack.c.l.b16 %v536
    %v569 = vunpack.c.l.b16 %v537
    %v570 = vunpack.c.l.b16 %v538
    %v571 = vunpack.c.l.b16 %v539
    %v572 = vunpack.c.l.b16 %v540
    %v573 = vunpack.c.l.b16 %v541
    %v574 = vunpack.c.l.b16 %v542
    %v575 = vunpack.c.l.b16 %v543
    %v576 = vunpack.c.l.b16 %v544
    %v577 = vunpack.c.l.b16 %v545
    %v578 = vunpack.c.l.b16 %v546
    %v579 = vunpack.c.l.b16 %v547
    %v580 = vpack.c.b16 %v565, %v564
    %v581 = vpack.c.b16 %v567, %v566
    %v582 = vpack.c.b16 %v569, %v568
    %v583 = vpack.c.b16 %v571, %v570
    %v584 = vpack.c.b16 %v573, %v572
    %v585 = vpack.c.b16 %v575, %v574
    %v586 = vpack.c.b16 %v577, %v576
    %v587 = vpack.c.b16 %v579, %v578
    %596 = vmatpush.bf16.msra.mxu0 %v587
    %597 = vmatpush.bf16.msra.mxu0 %v586
    %598 = vmatpush.bf16.msra.mxu0 %v585
    %599 = vmatpush.bf16.msra.mxu0 %v584
    %600 = vmatpush.bf16.msra.mxu0 %v583
    %601 = vmatpush.bf16.msra.mxu0 %v582
    %602 = vmatpush.bf16.msra.mxu0 %v581
    %603 = vmatpush.bf16.msra.mxu0 %v580
    %604 = vmatmul.bf16.gmra.mxu0 %v531
    %v605 = vpop.f32.mrf.mxu0
    %v606 = vadd.f32 0.0, %v605
    %v607 = vpop.f32.mrf.mxu0
    %608 = vdwg.mxu0
    %v609 = vmul.f32 %v606, %v606
    %v610 = vpack.c.bf16 %v606, %v606
    %v611 = vpack.c.bf16 %v609, %v609
    %612 = vmatpush.bf16.msra.mxu0 %v408
    %613 = vmatpush.bf16.msra.mxu0 %v406
    %614 = vmatpush.bf16.msra.mxu0 %v404
    %615 = vmatpush.bf16.msra.mxu0 %v402
    %616 = vmatpush.bf16.msra.mxu0 %v400
    %617 = vmatpush.bf16.msra.mxu0 %v398
    %618 = vmatpush.bf16.msra.mxu0 %v396
    %619 = vmatpush.bf16.msra.mxu0 %v394
    %620 = vmatmul.bf16.gmra.mxu0 %v610
    %v621 = vpop.f32.mrf.mxu0
    %v622 = vadd.f32 0.0, %v621
    %v623 = vpop.f32.mrf.mxu0
    %624 = vdwg.mxu0
    %625 = vmatpush.bf16.msra.mxu0 %v424
    %626 = vmatpush.bf16.msra.mxu0 %v422
    %627 = vmatpush.bf16.msra.mxu0 %v420
    %628 = vmatpush.bf16.msra.mxu0 %v418
    %629 = vmatpush.bf16.msra.mxu0 %v416
    %630 = vmatpush.bf16.msra.mxu0 %v414
    %631 = vmatpush.bf16.msra.mxu0 %v412
    %632 = vmatpush.bf16.msra.mxu0 %v410
    %633 = vmatmul.bf16.gmra.mxu0 %v611
    %v634 = vpop.f32.mrf.mxu0
    %v635 = vadd.f32 %v622, %v634
    %v636 = vpop.f32.mrf.mxu0
    %637 = vdwg.mxu0
    %638 = vmatpush.bf16.msra.mxu0 %v409
    %639 = vmatpush.bf16.msra.mxu0 %v407
    %640 = vmatpush.bf16.msra.mxu0 %v405
    %641 = vmatpush.bf16.msra.mxu0 %v403
    %642 = vmatpush.bf16.msra.mxu0 %v401
    %643 = vmatpush.bf16.msra.mxu0 %v399
    %644 = vmatpush.bf16.msra.mxu0 %v397
    %645 = vmatpush.bf16.msra.mxu0 %v395
    %646 = vmatmul.bf16.gmra.mxu0 %v610
    %v647 = vpop.f32.mrf.mxu0
    %v648 = vadd.f32 0.0, %v647
    %v649 = vpop.f32.mrf.mxu0
    %650 = vdwg.mxu0
    %651 = vmatpush.bf16.msra.mxu0 %v425
    %652 = vmatpush.bf16.msra.mxu0 %v423
    %653 = vmatpush.bf16.msra.mxu0 %v421
    %654 = vmatpush.bf16.msra.mxu0 %v419
    %655 = vmatpush.bf16.msra.mxu0 %v417
    %656 = vmatpush.bf16.msra.mxu0 %v415
    %657 = vmatpush.bf16.msra.mxu0 %v413
    %658 = vmatpush.bf16.msra.mxu0 %v411
    %659 = vmatmul.bf16.gmra.mxu0 %v611
    %v660 = vpop.f32.mrf.mxu0
    %v661 = vadd.f32 %v648, %v660
    %v662 = vpop.f32.mrf.mxu0
    %663 = vdwg.mxu0
    %v664 = vmul.f32 %v635, %v635
    %v665 = vsub.f32 %v661, %v664
    %v666 = vmax.f32 %v665, 0.0
    %v667 = vsub.f32 %v606, %v635
    %v668 = vadd.f32 %v666, 1e-05
    %v669 = vrsqrt.pop %v668
    %v670 = vmul.f32 %v669, %v668
    %v671 = vmul.f32 %v670, %v669
    %v672 = vmul.f32 0.5, %v671
    %v673 = vsub.f32 1.5, %v672
    %v674 = vmul.f32 %v669, %v673
    %vm675 = vweird.f32 %v668
    %vm676 = vweird.f32 %v669
    %vm677 = vmor %vm675, %vm676
    %v678 = vsel %vm677, %v669, %v674
    %v679 = vmul.f32 %v667, %v678
    %v680 = vperm.slane %v239, 0
    %v681 = vmul.f32 %v679, %v680
    %v682 = vperm.slane %v240, 0
    %v683 = vadd.f32 %v681, %v682
    %v684 = vadd.f32 %v683, %v292
    %v685 = vmax.f32 %v684, 0.0
    %v686 = vpack.c.bf16 %v685, %v685
    %v687 = vld [vmem:[#allocation8] sm:$0xf]
    %v688 = vld [vmem:[#allocation8 + $0x4] sm:$0xf]
    %v689 = vld [vmem:[#allocation8 + $0x8] sm:$0xf]
    %v690 = vld [vmem:[#allocation8 + $0xc] sm:$0xf]
    %v691 = vld [vmem:[#allocation8 + $0x10] sm:$0xf]
    %v692 = vld [vmem:[#allocation8 + $0x14] sm:$0xf]
    %v693 = vld [vmem:[#allocation8 + $0x18] sm:$0xf]
    %v694 = vld [vmem:[#allocation8 + $0x1c] sm:$0xf]
    %v695 = vld [vmem:[#allocation8 + $0x20] sm:$0xf]
    %v696 = vld [vmem:[#allocation8 + $0x24] sm:$0xf]
    %v697 = vld [vmem:[#allocation8 + $0x28] sm:$0xf]
    %v698 = vld [vmem:[#allocation8 + $0x2c] sm:$0xf]
    %v699 = vld [vmem:[#allocation8 + $0x30] sm:$0xf]
    %v700 = vld [vmem:[#allocation8 + $0x34] sm:$0xf]
    %v701 = vld [vmem:[#allocation8 + $0x38] sm:$0xf]
    %v702 = vld [vmem:[#allocation8 + $0x3c] sm:$0xf]
    %v703 = vld [vmem:[%s6] sm:$0x1]
    %v705 = vperm.slane %v703, 0
    %v723 = vunpack.c.l.b16 %v687
    %v724 = vunpack.c.l.b16 %v688
    %v725 = vunpack.c.l.b16 %v689
    %v726 = vunpack.c.l.b16 %v690
    %v727 = vunpack.c.l.b16 %v691
    %v728 = vunpack.c.l.b16 %v692
    %v729 = vunpack.c.l.b16 %v693
    %v730 = vunpack.c.l.b16 %v694
    %v731 = vunpack.c.l.b16 %v695
    %v732 = vunpack.c.l.b16 %v696
    %v733 = vunpack.c.l.b16 %v697
    %v734 = vunpack.c.l.b16 %v698
    %v735 = vunpack.c.l.b16 %v699
    %v736 = vunpack.c.l.b16 %v700
    %v737 = vunpack.c.l.b16 %v701
    %v738 = vunpack.c.l.b16 %v702
    %v739 = vpack.c.b16 %v724, %v723
    %v740 = vpack.c.b16 %v726, %v725
    %v741 = vpack.c.b16 %v728, %v727
    %v742 = vpack.c.b16 %v730, %v729
    %v743 = vpack.c.b16 %v732, %v731
    %v744 = vpack.c.b16 %v734, %v733
    %v745 = vpack.c.b16 %v736, %v735
    %v746 = vpack.c.b16 %v738, %v737
    %755 = vmatpush.bf16.msra.mxu0 %v746
    %756 = vmatpush.bf16.msra.mxu0 %v745
    %757 = vmatpush.bf16.msra.mxu0 %v744
    %758 = vmatpush.bf16.msra.mxu0 %v743
    %759 = vmatpush.bf16.msra.mxu0 %v742
    %760 = vmatpush.bf16.msra.mxu0 %v741
    %761 = vmatpush.bf16.msra.mxu0 %v740
    %762 = vmatpush.bf16.msra.mxu0 %v739
    %763 = vmatmul.bf16.gmra.mxu0 %v686
    %v764 = vpop.f32.mrf.mxu0
    %v765 = vadd.f32 %v705, %v764
    %v766 = vpop.f32.mrf.mxu0
    %767 = vdwg.mxu0
    %768 = vst [vmem:[#allocation19] sm:$0xff] %v765
    %v769 = vld [vmem:[#allocation17] sm:$0x1]
    %v770 = vld [vmem:[#allocation17 + $0x1] sm:$0x1]
    %v771 = vld [vmem:[#allocation17 + $0x2] sm:$0x1]
    %v772 = vld [vmem:[#allocation17 + $0x3] sm:$0x1]
    %v773 = vld [vmem:[#allocation17 + $0x4] sm:$0x1]
    %v774 = vld [vmem:[#allocation17 + $0x5] sm:$0x1]
    %v775 = vld [vmem:[#allocation17 + $0x6] sm:$0x1]
    %v776 = vld [vmem:[#allocation17 + $0x7] sm:$0x1]
    %v777 = vld [vmem:[#allocation17 + $0x8] sm:$0x1]
    %v778 = vpack.c.bf16 %v765, %v765
    %v779 = vld [vmem:[#allocation11] sm:$0xf]
    %v780 = vld [vmem:[#allocation11 + $0x4] sm:$0xf]
    %v781 = vld [vmem:[#allocation11 + $0x8] sm:$0xf]
    %v782 = vld [vmem:[#allocation11 + $0xc] sm:$0xf]
    %v783 = vld [vmem:[#allocation11 + $0x10] sm:$0xf]
    %v784 = vld [vmem:[#allocation11 + $0x14] sm:$0xf]
    %v785 = vld [vmem:[#allocation11 + $0x18] sm:$0xf]
    %v786 = vld [vmem:[#allocation11 + $0x1c] sm:$0xf]
    %v787 = vld [vmem:[#allocation11 + $0x20] sm:$0xf]
    %v788 = vld [vmem:[#allocation11 + $0x24] sm:$0xf]
    %v789 = vld [vmem:[#allocation11 + $0x28] sm:$0xf]
    %v790 = vld [vmem:[#allocation11 + $0x2c] sm:$0xf]
    %v791 = vld [vmem:[#allocation11 + $0x30] sm:$0xf]
    %v792 = vld [vmem:[#allocation11 + $0x34] sm:$0xf]
    %v793 = vld [vmem:[#allocation11 + $0x38] sm:$0xf]
    %v794 = vld [vmem:[#allocation11 + $0x3c] sm:$0xf]
    %v795 = vperm.slane %v769, 0
    %v812 = vunpack.c.l.b16 %v779
    %v813 = vunpack.c.l.b16 %v780
    %v814 = vunpack.c.l.b16 %v781
    %v815 = vunpack.c.l.b16 %v782
    %v816 = vunpack.c.l.b16 %v783
    %v817 = vunpack.c.l.b16 %v784
    %v818 = vunpack.c.l.b16 %v785
    %v819 = vunpack.c.l.b16 %v786
    %v820 = vunpack.c.l.b16 %v787
    %v821 = vunpack.c.l.b16 %v788
    %v822 = vunpack.c.l.b16 %v789
    %v823 = vunpack.c.l.b16 %v790
    %v824 = vunpack.c.l.b16 %v791
    %v825 = vunpack.c.l.b16 %v792
    %v826 = vunpack.c.l.b16 %v793
    %v827 = vunpack.c.l.b16 %v794
    %v828 = vpack.c.b16 %v813, %v812
    %v829 = vpack.c.b16 %v815, %v814
    %v830 = vpack.c.b16 %v817, %v816
    %v831 = vpack.c.b16 %v819, %v818
    %v832 = vpack.c.b16 %v821, %v820
    %v833 = vpack.c.b16 %v823, %v822
    %v834 = vpack.c.b16 %v825, %v824
    %v835 = vpack.c.b16 %v827, %v826
    %844 = vmatpush.bf16.msra.mxu0 %v835
    %845 = vmatpush.bf16.msra.mxu0 %v834
    %846 = vmatpush.bf16.msra.mxu0 %v833
    %847 = vmatpush.bf16.msra.mxu0 %v832
    %848 = vmatpush.bf16.msra.mxu0 %v831
    %849 = vmatpush.bf16.msra.mxu0 %v830
    %850 = vmatpush.bf16.msra.mxu0 %v829
    %851 = vmatpush.bf16.msra.mxu0 %v828
    %852 = vmatmul.bf16.gmra.mxu0 %v778
    %v853 = vpop.f32.mrf.mxu0
    %v854 = vadd.f32 %v795, %v853
    %v855 = vpop.f32.mrf.mxu0
    %856 = vdwg.mxu0
    %v857 = vmax.f32 %v854, 0.0
    %v858 = vpack.c.bf16 %v857, %v857
    %v859 = vld [vmem:[#allocation14] sm:$0xf]
    %v860 = vld [vmem:[#allocation14 + $0x4] sm:$0xf]
    %v861 = vld [vmem:[#allocation14 + $0x8] sm:$0xf]
    %v862 = vld [vmem:[#allocation14 + $0xc] sm:$0xf]
    %v863 = vld [vmem:[#allocation14 + $0x10] sm:$0xf]
    %v864 = vld [vmem:[#allocation14 + $0x14] sm:$0xf]
    %v865 = vld [vmem:[#allocation14 + $0x18] sm:$0xf]
    %v866 = vld [vmem:[#allocation14 + $0x1c] sm:$0xf]
    %v867 = vld [vmem:[#allocation14 + $0x20] sm:$0xf]
    %v868 = vld [vmem:[#allocation14 + $0x24] sm:$0xf]
    %v869 = vld [vmem:[#allocation14 + $0x28] sm:$0xf]
    %v870 = vld [vmem:[#allocation14 + $0x2c] sm:$0xf]
    %v871 = vld [vmem:[#allocation14 + $0x30] sm:$0xf]
    %v872 = vld [vmem:[#allocation14 + $0x34] sm:$0xf]
    %v873 = vld [vmem:[#allocation14 + $0x38] sm:$0xf]
    %v874 = vld [vmem:[#allocation14 + $0x3c] sm:$0xf]
    %v891 = vunpack.c.l.b16 %v859
    %v892 = vunpack.c.l.b16 %v860
    %v893 = vunpack.c.l.b16 %v861
    %v894 = vunpack.c.l.b16 %v862
    %v895 = vunpack.c.l.b16 %v863
    %v896 = vunpack.c.l.b16 %v864
    %v897 = vunpack.c.l.b16 %v865
    %v898 = vunpack.c.l.b16 %v866
    %v899 = vunpack.c.l.b16 %v867
    %v900 = vunpack.c.l.b16 %v868
    %v901 = vunpack.c.l.b16 %v869
    %v902 = vunpack.c.l.b16 %v870
    %v903 = vunpack.c.l.b16 %v871
    %v904 = vunpack.c.l.b16 %v872
    %v905 = vunpack.c.l.b16 %v873
    %v906 = vunpack.c.l.b16 %v874
    %v907 = vpack.c.b16 %v892, %v891
    %v908 = vpack.c.b16 %v894, %v893
    %v909 = vpack.c.b16 %v896, %v895
    %v910 = vpack.c.b16 %v898, %v897
    %v911 = vpack.c.b16 %v900, %v899
    %v912 = vpack.c.b16 %v902, %v901
    %v913 = vpack.c.b16 %v904, %v903
    %v914 = vpack.c.b16 %v906, %v905
    %923 = vmatpush.bf16.msra.mxu0 %v914
    %924 = vmatpush.bf16.msra.mxu0 %v913
    %925 = vmatpush.bf16.msra.mxu0 %v912
    %926 = vmatpush.bf16.msra.mxu0 %v911
    %927 = vmatpush.bf16.msra.mxu0 %v910
    %928 = vmatpush.bf16.msra.mxu0 %v909
    %929 = vmatpush.bf16.msra.mxu0 %v908
    %930 = vmatpush.bf16.msra.mxu0 %v907
    %931 = vmatmul.bf16.gmra.mxu0 %v858
    %v932 = vpop.f32.mrf.mxu0
    %v933 = vadd.f32 0.0, %v932
    %v934 = vpop.f32.mrf.mxu0
    %935 = vdwg.mxu0
    %v936 = vmul.f32 %v933, %v933
    %v937 = vpack.c.bf16 %v933, %v933
    %v938 = vpack.c.bf16 %v936, %v936
    %939 = vmatpush.bf16.msra.mxu0 %v408
    %940 = vmatpush.bf16.msra.mxu0 %v406
    %941 = vmatpush.bf16.msra.mxu0 %v404
    %942 = vmatpush.bf16.msra.mxu0 %v402
    %943 = vmatpush.bf16.msra.mxu0 %v400
    %944 = vmatpush.bf16.msra.mxu0 %v398
    %945 = vmatpush.bf16.msra.mxu0 %v396
    %946 = vmatpush.bf16.msra.mxu0 %v394
    %947 = vmatmul.bf16.gmra.mxu0 %v937
    %v948 = vpop.f32.mrf.mxu0
    %v949 = vadd.f32 0.0, %v948
    %v950 = vpop.f32.mrf.mxu0
    %951 = vdwg.mxu0
    %952 = vmatpush.bf16.msra.mxu0 %v424
    %953 = vmatpush.bf16.msra.mxu0 %v422
    %954 = vmatpush.bf16.msra.mxu0 %v420
    %955 = vmatpush.bf16.msra.mxu0 %v418
    %956 = vmatpush.bf16.msra.mxu0 %v416
    %957 = vmatpush.bf16.msra.mxu0 %v414
    %958 = vmatpush.bf16.msra.mxu0 %v412
    %959 = vmatpush.bf16.msra.mxu0 %v410
    %960 = vmatmul.bf16.gmra.mxu0 %v938
    %v961 = vpop.f32.mrf.mxu0
    %v962 = vadd.f32 %v949, %v961
    %v963 = vpop.f32.mrf.mxu0
    %964 = vdwg.mxu0
    %965 = vmatpush.bf16.msra.mxu0 %v409
    %966 = vmatpush.bf16.msra.mxu0 %v407
    %967 = vmatpush.bf16.msra.mxu0 %v405
    %968 = vmatpush.bf16.msra.mxu0 %v403
    %969 = vmatpush.bf16.msra.mxu0 %v401
    %970 = vmatpush.bf16.msra.mxu0 %v399
    %971 = vmatpush.bf16.msra.mxu0 %v397
    %972 = vmatpush.bf16.msra.mxu0 %v395
    %973 = vmatmul.bf16.gmra.mxu0 %v937
    %v974 = vpop.f32.mrf.mxu0
    %v975 = vadd.f32 0.0, %v974
    %v976 = vpop.f32.mrf.mxu0
    %977 = vdwg.mxu0
    %978 = vmatpush.bf16.msra.mxu0 %v425
    %979 = vmatpush.bf16.msra.mxu0 %v423
    %980 = vmatpush.bf16.msra.mxu0 %v421
    %981 = vmatpush.bf16.msra.mxu0 %v419
    %982 = vmatpush.bf16.msra.mxu0 %v417
    %983 = vmatpush.bf16.msra.mxu0 %v415
    %984 = vmatpush.bf16.msra.mxu0 %v413
    %985 = vmatpush.bf16.msra.mxu0 %v411
    %986 = vmatmul.bf16.gmra.mxu0 %v938
    %v987 = vpop.f32.mrf.mxu0
    %v988 = vadd.f32 %v975, %v987
    %v989 = vpop.f32.mrf.mxu0
    %990 = vdwg.mxu0
    %v991 = vmul.f32 %v962, %v962
    %v992 = vsub.f32 %v988, %v991
    %v993 = vmax.f32 %v992, 0.0
    %v994 = vsub.f32 %v933, %v962
    %v995 = vadd.f32 %v993, 1e-05
    %v996 = vrsqrt.pop %v995
    %v997 = vmul.f32 %v996, %v995
    %v998 = vmul.f32 %v997, %v996
    %v999 = vmul.f32 0.5, %v998
    %v1000 = vsub.f32 1.5, %v999
    %v1001 = vmul.f32 %v996, %v1000
    %vm1002 = vweird.f32 %v995
    %vm1003 = vweird.f32 %v996
    %vm1004 = vmor %vm1002, %vm1003
    %v1005 = vsel %vm1004, %v996, %v1001
    %v1006 = vmul.f32 %v994, %v1005
    %v1007 = vperm.slane %v770, 0
    %v1008 = vmul.f32 %v1006, %v1007
    %v1009 = vperm.slane %v771, 0
    %v1010 = vadd.f32 %v1008, %v1009
    %v1011 = vmax.f32 %v1010, 0.0
    %v1012 = vpack.c.bf16 %v1011, %v1011
    %s1013 = scalar_lea.vmem [#allocation14], 64
    %v1014 = vld [vmem:[%s1013] sm:$0xf]
    %v1015 = vld [vmem:[%s1013 + $0x4] sm:$0xf]
    %v1016 = vld [vmem:[%s1013 + $0x8] sm:$0xf]
    %v1017 = vld [vmem:[%s1013 + $0xc] sm:$0xf]
    %v1018 = vld [vmem:[%s1013 + $0x10] sm:$0xf]
    %v1019 = vld [vmem:[%s1013 + $0x14] sm:$0xf]
    %v1020 = vld [vmem:[%s1013 + $0x18] sm:$0xf]
    %v1021 = vld [vmem:[%s1013 + $0x1c] sm:$0xf]
    %v1022 = vld [vmem:[%s1013 + $0x20] sm:$0xf]
    %v1023 = vld [vmem:[%s1013 + $0x24] sm:$0xf]
    %v1024 = vld [vmem:[%s1013 + $0x28] sm:$0xf]
    %v1025 = vld [vmem:[%s1013 + $0x2c] sm:$0xf]
    %v1026 = vld [vmem:[%s1013 + $0x30] sm:$0xf]
    %v1027 = vld [vmem:[%s1013 + $0x34] sm:$0xf]
    %v1028 = vld [vmem:[%s1013 + $0x38] sm:$0xf]
    %v1029 = vld [vmem:[%s1013 + $0x3c] sm:$0xf]
    %v1030 = vld [vmem:[#allocation13] sm:$0xf]
    %v1031 = vld [vmem:[#allocation13 + $0x4] sm:$0xf]
    %v1032 = vld [vmem:[#allocation13 + $0x8] sm:$0xf]
    %v1033 = vld [vmem:[#allocation13 + $0xc] sm:$0xf]
    %v1038 = vunpack.c.l.b16 %v1030
    %v1039 = vunpack.c.l.b16 %v1031
    %v1040 = vunpack.c.l.b16 %v1032
    %v1041 = vunpack.c.l.b16 %v1033
    %v1042 = vpack.c.b16 %v1039, %v1038
    %v1043 = vpack.c.b16 %v1041, %v1040
    %1046 = vmatpush.bf16.msra.mxu0 0
    %1047 = vmatpush.bf16.msra.mxu0 0
    %1048 = vmatpush.bf16.msra.mxu0 0
    %1049 = vmatpush.bf16.msra.mxu0 0
    %1050 = vmatpush.bf16.msra.mxu0 0
    %1051 = vmatpush.bf16.msra.mxu0 0
    %1052 = vmatpush.bf16.msra.mxu0 %v1043
    %1053 = vmatpush.bf16.msra.mxu0 %v1042
    %1054 = vmatmul.bf16.gmra.mxu0 %v267
    %v1055 = vpop.f32.mrf.mxu0
    %v1056 = vadd.f32 0.0, %v1055
    %v1057 = vpop.f32.mrf.mxu0
    %1058 = vdwg.mxu0
    %v1075 = vunpack.c.l.b16 %v1014
    %v1076 = vunpack.c.l.b16 %v1015
    %v1077 = vunpack.c.l.b16 %v1016
    %v1078 = vunpack.c.l.b16 %v1017
    %v1079 = vunpack.c.l.b16 %v1018
    %v1080 = vunpack.c.l.b16 %v1019
    %v1081 = vunpack.c.l.b16 %v1020
    %v1082 = vunpack.c.l.b16 %v1021
    %v1083 = vunpack.c.l.b16 %v1022
    %v1084 = vunpack.c.l.b16 %v1023
    %v1085 = vunpack.c.l.b16 %v1024
    %v1086 = vunpack.c.l.b16 %v1025
    %v1087 = vunpack.c.l.b16 %v1026
    %v1088 = vunpack.c.l.b16 %v1027
    %v1089 = vunpack.c.l.b16 %v1028
    %v1090 = vunpack.c.l.b16 %v1029
    %v1091 = vpack.c.b16 %v1076, %v1075
    %v1092 = vpack.c.b16 %v1078, %v1077
    %v1093 = vpack.c.b16 %v1080, %v1079
    %v1094 = vpack.c.b16 %v1082, %v1081
    %v1095 = vpack.c.b16 %v1084, %v1083
    %v1096 = vpack.c.b16 %v1086, %v1085
    %v1097 = vpack.c.b16 %v1088, %v1087
    %v1098 = vpack.c.b16 %v1090, %v1089
    %1107 = vmatpush.bf16.msra.mxu0 %v1098
    %1108 = vmatpush.bf16.msra.mxu0 %v1097
    %1109 = vmatpush.bf16.msra.mxu0 %v1096
    %1110 = vmatpush.bf16.msra.mxu0 %v1095
    %1111 = vmatpush.bf16.msra.mxu0 %v1094
    %1112 = vmatpush.bf16.msra.mxu0 %v1093
    %1113 = vmatpush.bf16.msra.mxu0 %v1092
    %1114 = vmatpush.bf16.msra.mxu0 %v1091
    %1115 = vmatmul.bf16.gmra.mxu0 %v1012
    %v1116 = vpop.f32.mrf.mxu0
    %v1117 = vadd.f32 %v1056, %v1116
    %v1118 = vpop.f32.mrf.mxu0
    %1119 = vdwg.mxu0
    %v1120 = vmul.f32 %v1117, %v1117
    %v1121 = vpack.c.bf16 %v1117, %v1117
    %v1122 = vpack.c.bf16 %v1120, %v1120
    %1123 = vmatpush.bf16.msra.mxu0 %v408
    %1124 = vmatpush.bf16.msra.mxu0 %v406
    %1125 = vmatpush.bf16.msra.mxu0 %v404
    %1126 = vmatpush.bf16.msra.mxu0 %v402
    %1127 = vmatpush.bf16.msra.mxu0 %v400
    %1128 = vmatpush.bf16.msra.mxu0 %v398
    %1129 = vmatpush.bf16.msra.mxu0 %v396
    %1130 = vmatpush.bf16.msra.mxu0 %v394
    %1131 = vmatmul.bf16.gmra.mxu0 %v1121
    %v1132 = vpop.f32.mrf.mxu0
    %v1133 = vadd.f32 0.0, %v1132
    %v1134 = vpop.f32.mrf.mxu0
    %1135 = vdwg.mxu0
    %1136 = vmatpush.bf16.msra.mxu0 %v424
    %1137 = vmatpush.bf16.msra.mxu0 %v422
    %1138 = vmatpush.bf16.msra.mxu0 %v420
    %1139 = vmatpush.bf16.msra.mxu0 %v418
    %1140 = vmatpush.bf16.msra.mxu0 %v416
    %1141 = vmatpush.bf16.msra.mxu0 %v414
    %1142 = vmatpush.bf16.msra.mxu0 %v412
    %1143 = vmatpush.bf16.msra.mxu0 %v410
    %1144 = vmatmul.bf16.gmra.mxu0 %v1122
    %v1145 = vpop.f32.mrf.mxu0
    %v1146 = vadd.f32 %v1133, %v1145
    %v1147 = vpop.f32.mrf.mxu0
    %1148 = vdwg.mxu0
    %1149 = vmatpush.bf16.msra.mxu0 %v409
    %1150 = vmatpush.bf16.msra.mxu0 %v407
    %1151 = vmatpush.bf16.msra.mxu0 %v405
    %1152 = vmatpush.bf16.msra.mxu0 %v403
    %1153 = vmatpush.bf16.msra.mxu0 %v401
    %1154 = vmatpush.bf16.msra.mxu0 %v399
    %1155 = vmatpush.bf16.msra.mxu0 %v397
    %1156 = vmatpush.bf16.msra.mxu0 %v395
    %1157 = vmatmul.bf16.gmra.mxu0 %v1121
    %v1158 = vpop.f32.mrf.mxu0
    %v1159 = vadd.f32 0.0, %v1158
    %v1160 = vpop.f32.mrf.mxu0
    %1161 = vdwg.mxu0
    %1162 = vmatpush.bf16.msra.mxu0 %v425
    %1163 = vmatpush.bf16.msra.mxu0 %v423
    %1164 = vmatpush.bf16.msra.mxu0 %v421
    %1165 = vmatpush.bf16.msra.mxu0 %v419
    %1166 = vmatpush.bf16.msra.mxu0 %v417
    %1167 = vmatpush.bf16.msra.mxu0 %v415
    %1168 = vmatpush.bf16.msra.mxu0 %v413
    %1169 = vmatpush.bf16.msra.mxu0 %v411
    %1170 = vmatmul.bf16.gmra.mxu0 %v1122
    %v1171 = vpop.f32.mrf.mxu0
    %v1172 = vadd.f32 %v1159, %v1171
    %v1173 = vpop.f32.mrf.mxu0
    %1174 = vdwg.mxu0
    %v1175 = vmul.f32 %v1146, %v1146
    %v1176 = vsub.f32 %v1172, %v1175
    %v1177 = vmax.f32 %v1176, 0.0
    %v1178 = vsub.f32 %v1117, %v1146
    %v1179 = vadd.f32 %v1177, 1e-05
    %v1180 = vrsqrt.pop %v1179
    %v1181 = vmul.f32 %v1180, %v1179
    %v1182 = vmul.f32 %v1181, %v1180
    %v1183 = vmul.f32 0.5, %v1182
    %v1184 = vsub.f32 1.5, %v1183
    %v1185 = vmul.f32 %v1180, %v1184
    %vm1186 = vweird.f32 %v1179
    %vm1187 = vweird.f32 %v1180
    %vm1188 = vmor %vm1186, %vm1187
    %v1189 = vsel %vm1188, %v1180, %v1185
    %v1190 = vmul.f32 %v1178, %v1189
    %v1191 = vperm.slane %v772, 0
    %v1192 = vmul.f32 %v1190, %v1191
    %v1193 = vperm.slane %v773, 0
    %v1194 = vadd.f32 %v1192, %v1193
    %v1195 = vmax.f32 %v1194, 0.0
    %v1196 = vpack.c.bf16 %v1195, %v1195
    %s1197 = scalar_lea.vmem [#allocation14], 128
    %v1198 = vld [vmem:[%s1197] sm:$0xf]
    %v1199 = vld [vmem:[%s1197 + $0x4] sm:$0xf]
    %v1200 = vld [vmem:[%s1197 + $0x8] sm:$0xf]
    %v1201 = vld [vmem:[%s1197 + $0xc] sm:$0xf]
    %v1202 = vld [vmem:[%s1197 + $0x10] sm:$0xf]
    %v1203 = vld [vmem:[%s1197 + $0x14] sm:$0xf]
    %v1204 = vld [vmem:[%s1197 + $0x18] sm:$0xf]
    %v1205 = vld [vmem:[%s1197 + $0x1c] sm:$0xf]
    %v1206 = vld [vmem:[%s1197 + $0x20] sm:$0xf]
    %v1207 = vld [vmem:[%s1197 + $0x24] sm:$0xf]
    %v1208 = vld [vmem:[%s1197 + $0x28] sm:$0xf]
    %v1209 = vld [vmem:[%s1197 + $0x2c] sm:$0xf]
    %v1210 = vld [vmem:[%s1197 + $0x30] sm:$0xf]
    %v1211 = vld [vmem:[%s1197 + $0x34] sm:$0xf]
    %v1212 = vld [vmem:[%s1197 + $0x38] sm:$0xf]
    %v1213 = vld [vmem:[%s1197 + $0x3c] sm:$0xf]
    %v1230 = vunpack.c.l.b16 %v1198
    %v1231 = vunpack.c.l.b16 %v1199
    %v1232 = vunpack.c.l.b16 %v1200
    %v1233 = vunpack.c.l.b16 %v1201
    %v1234 = vunpack.c.l.b16 %v1202
    %v1235 = vunpack.c.l.b16 %v1203
    %v1236 = vunpack.c.l.b16 %v1204
    %v1237 = vunpack.c.l.b16 %v1205
    %v1238 = vunpack.c.l.b16 %v1206
    %v1239 = vunpack.c.l.b16 %v1207
    %v1240 = vunpack.c.l.b16 %v1208
    %v1241 = vunpack.c.l.b16 %v1209
    %v1242 = vunpack.c.l.b16 %v1210
    %v1243 = vunpack.c.l.b16 %v1211
    %v1244 = vunpack.c.l.b16 %v1212
    %v1245 = vunpack.c.l.b16 %v1213
    %v1246 = vpack.c.b16 %v1231, %v1230
    %v1247 = vpack.c.b16 %v1233, %v1232
    %v1248 = vpack.c.b16 %v1235, %v1234
    %v1249 = vpack.c.b16 %v1237, %v1236
    %v1250 = vpack.c.b16 %v1239, %v1238
    %v1251 = vpack.c.b16 %v1241, %v1240
    %v1252 = vpack.c.b16 %v1243, %v1242
    %v1253 = vpack.c.b16 %v1245, %v1244
    %1262 = vmatpush.bf16.msra.mxu0 %v1253
    %1263 = vmatpush.bf16.msra.mxu0 %v1252
    %1264 = vmatpush.bf16.msra.mxu0 %v1251
    %1265 = vmatpush.bf16.msra.mxu0 %v1250
    %1266 = vmatpush.bf16.msra.mxu0 %v1249
    %1267 = vmatpush.bf16.msra.mxu0 %v1248
    %1268 = vmatpush.bf16.msra.mxu0 %v1247
    %1269 = vmatpush.bf16.msra.mxu0 %v1246
    %1270 = vmatmul.bf16.gmra.mxu0 %v1196
    %v1271 = vpop.f32.mrf.mxu0
    %v1272 = vadd.f32 0.0, %v1271
    %v1273 = vpop.f32.mrf.mxu0
    %1274 = vdwg.mxu0
    %v1275 = vmul.f32 %v1272, %v1272
    %v1276 = vpack.c.bf16 %v1272, %v1272
    %v1277 = vpack.c.bf16 %v1275, %v1275
    %1278 = vmatpush.bf16.msra.mxu0 %v408
    %1279 = vmatpush.bf16.msra.mxu0 %v406
    %1280 = vmatpush.bf16.msra.mxu0 %v404
    %1281 = vmatpush.bf16.msra.mxu0 %v402
    %1282 = vmatpush.bf16.msra.mxu0 %v400
    %1283 = vmatpush.bf16.msra.mxu0 %v398
    %1284 = vmatpush.bf16.msra.mxu0 %v396
    %1285 = vmatpush.bf16.msra.mxu0 %v394
    %1286 = vmatmul.bf16.gmra.mxu0 %v1276
    %v1287 = vpop.f32.mrf.mxu0
    %v1288 = vadd.f32 0.0, %v1287
    %v1289 = vpop.f32.mrf.mxu0
    %1290 = vdwg.mxu0
    %1291 = vmatpush.bf16.msra.mxu0 %v424
    %1292 = vmatpush.bf16.msra.mxu0 %v422
    %1293 = vmatpush.bf16.msra.mxu0 %v420
    %1294 = vmatpush.bf16.msra.mxu0 %v418
    %1295 = vmatpush.bf16.msra.mxu0 %v416
    %1296 = vmatpush.bf16.msra.mxu0 %v414
    %1297 = vmatpush.bf16.msra.mxu0 %v412
    %1298 = vmatpush.bf16.msra.mxu0 %v410
    %1299 = vmatmul.bf16.gmra.mxu0 %v1277
    %v1300 = vpop.f32.mrf.mxu0
    %v1301 = vadd.f32 %v1288, %v1300
    %v1302 = vpop.f32.mrf.mxu0
    %1303 = vdwg.mxu0
    %1304 = vmatpush.bf16.msra.mxu0 %v409
    %1305 = vmatpush.bf16.msra.mxu0 %v407
    %1306 = vmatpush.bf16.msra.mxu0 %v405
    %1307 = vmatpush.bf16.msra.mxu0 %v403
    %1308 = vmatpush.bf16.msra.mxu0 %v401
    %1309 = vmatpush.bf16.msra.mxu0 %v399
    %1310 = vmatpush.bf16.msra.mxu0 %v397
    %1311 = vmatpush.bf16.msra.mxu0 %v395
    %1312 = vmatmul.bf16.gmra.mxu0 %v1276
    %v1313 = vpop.f32.mrf.mxu0
    %v1314 = vadd.f32 0.0, %v1313
    %v1315 = vpop.f32.mrf.mxu0
    %1316 = vdwg.mxu0
    %1317 = vmatpush.bf16.msra.mxu0 %v425
    %1318 = vmatpush.bf16.msra.mxu0 %v423
    %1319 = vmatpush.bf16.msra.mxu0 %v421
    %1320 = vmatpush.bf16.msra.mxu0 %v419
    %1321 = vmatpush.bf16.msra.mxu0 %v417
    %1322 = vmatpush.bf16.msra.mxu0 %v415
    %1323 = vmatpush.bf16.msra.mxu0 %v413
    %1324 = vmatpush.bf16.msra.mxu0 %v411
    %1325 = vmatmul.bf16.gmra.mxu0 %v1277
    %v1326 = vpop.f32.mrf.mxu0
    %v1327 = vadd.f32 %v1314, %v1326
    %v1328 = vpop.f32.mrf.mxu0
    %1329 = vdwg.mxu0
    %v1330 = vmul.f32 %v1301, %v1301
    %v1331 = vsub.f32 %v1327, %v1330
    %v1332 = vmax.f32 %v1331, 0.0
    %v1333 = vsub.f32 %v1272, %v1301
    %v1334 = vadd.f32 %v1332, 1e-05
    %v1335 = vrsqrt.pop %v1334
    %v1336 = vmul.f32 %v1335, %v1334
    %v1337 = vmul.f32 %v1336, %v1335
    %v1338 = vmul.f32 0.5, %v1337
    %v1339 = vsub.f32 1.5, %v1338
    %v1340 = vmul.f32 %v1335, %v1339
    %vm1341 = vweird.f32 %v1334
    %vm1342 = vweird.f32 %v1335
    %vm1343 = vmor %vm1341, %vm1342
    %v1344 = vsel %vm1343, %v1335, %v1340
    %v1345 = vmul.f32 %v1333, %v1344
    %v1346 = vperm.slane %v774, 0
    %v1347 = vmul.f32 %v1345, %v1346
    %v1348 = vperm.slane %v775, 0
    %v1349 = vadd.f32 %v1347, %v1348
    %v1350 = vmax.f32 %v1349, 0.0
    %v1351 = vpack.c.bf16 %v1350, %v1350
    %s1352 = scalar_lea.vmem [#allocation14], 192
    %v1353 = vld [vmem:[%s1352] sm:$0xf]
    %v1354 = vld [vmem:[%s1352 + $0x4] sm:$0xf]
    %v1355 = vld [vmem:[%s1352 + $0x8] sm:$0xf]
    %v1356 = vld [vmem:[%s1352 + $0xc] sm:$0xf]
    %v1357 = vld [vmem:[%s1352 + $0x10] sm:$0xf]
    %v1358 = vld [vmem:[%s1352 + $0x14] sm:$0xf]
    %v1359 = vld [vmem:[%s1352 + $0x18] sm:$0xf]
    %v1360 = vld [vmem:[%s1352 + $0x1c] sm:$0xf]
    %v1361 = vld [vmem:[%s1352 + $0x20] sm:$0xf]
    %v1362 = vld [vmem:[%s1352 + $0x24] sm:$0xf]
    %v1363 = vld [vmem:[%s1352 + $0x28] sm:$0xf]
    %v1364 = vld [vmem:[%s1352 + $0x2c] sm:$0xf]
    %v1365 = vld [vmem:[%s1352 + $0x30] sm:$0xf]
    %v1366 = vld [vmem:[%s1352 + $0x34] sm:$0xf]
    %v1367 = vld [vmem:[%s1352 + $0x38] sm:$0xf]
    %v1368 = vld [vmem:[%s1352 + $0x3c] sm:$0xf]
    %v1385 = vunpack.c.l.b16 %v1353
    %v1386 = vunpack.c.l.b16 %v1354
    %v1387 = vunpack.c.l.b16 %v1355
    %v1388 = vunpack.c.l.b16 %v1356
    %v1389 = vunpack.c.l.b16 %v1357
    %v1390 = vunpack.c.l.b16 %v1358
    %v1391 = vunpack.c.l.b16 %v1359
    %v1392 = vunpack.c.l.b16 %v1360
    %v1393 = vunpack.c.l.b16 %v1361
    %v1394 = vunpack.c.l.b16 %v1362
    %v1395 = vunpack.c.l.b16 %v1363
    %v1396 = vunpack.c.l.b16 %v1364
    %v1397 = vunpack.c.l.b16 %v1365
    %v1398 = vunpack.c.l.b16 %v1366
    %v1399 = vunpack.c.l.b16 %v1367
    %v1400 = vunpack.c.l.b16 %v1368
    %v1401 = vpack.c.b16 %v1386, %v1385
    %v1402 = vpack.c.b16 %v1388, %v1387
    %v1403 = vpack.c.b16 %v1390, %v1389
    %v1404 = vpack.c.b16 %v1392, %v1391
    %v1405 = vpack.c.b16 %v1394, %v1393
    %v1406 = vpack.c.b16 %v1396, %v1395
    %v1407 = vpack.c.b16 %v1398, %v1397
    %v1408 = vpack.c.b16 %v1400, %v1399
    %1417 = vmatpush.bf16.msra.mxu0 %v1408
    %1418 = vmatpush.bf16.msra.mxu0 %v1407
    %1419 = vmatpush.bf16.msra.mxu0 %v1406
    %1420 = vmatpush.bf16.msra.mxu0 %v1405
    %1421 = vmatpush.bf16.msra.mxu0 %v1404
    %1422 = vmatpush.bf16.msra.mxu0 %v1403
    %1423 = vmatpush.bf16.msra.mxu0 %v1402
    %1424 = vmatpush.bf16.msra.mxu0 %v1401
    %1425 = vmatmul.bf16.gmra.mxu0 %v1351
    %v1426 = vpop.f32.mrf.mxu0
    %v1427 = vadd.f32 0.0, %v1426
    %v1428 = vpop.f32.mrf.mxu0
    %1429 = vdwg.mxu0
    %v1430 = vmul.f32 %v1427, %v1427
    %v1431 = vpack.c.bf16 %v1427, %v1427
    %v1432 = vpack.c.bf16 %v1430, %v1430
    %1433 = vmatpush.bf16.msra.mxu0 %v408
    %1434 = vmatpush.bf16.msra.mxu0 %v406
    %1435 = vmatpush.bf16.msra.mxu0 %v404
    %1436 = vmatpush.bf16.msra.mxu0 %v402
    %1437 = vmatpush.bf16.msra.mxu0 %v400
    %1438 = vmatpush.bf16.msra.mxu0 %v398
    %1439 = vmatpush.bf16.msra.mxu0 %v396
    %1440 = vmatpush.bf16.msra.mxu0 %v394
    %1441 = vmatmul.bf16.gmra.mxu0 %v1431
    %v1442 = vpop.f32.mrf.mxu0
    %v1443 = vadd.f32 0.0, %v1442
    %v1444 = vpop.f32.mrf.mxu0
    %1445 = vdwg.mxu0
    %1446 = vmatpush.bf16.msra.mxu0 %v424
    %1447 = vmatpush.bf16.msra.mxu0 %v422
    %1448 = vmatpush.bf16.msra.mxu0 %v420
    %1449 = vmatpush.bf16.msra.mxu0 %v418
    %1450 = vmatpush.bf16.msra.mxu0 %v416
    %1451 = vmatpush.bf16.msra.mxu0 %v414
    %1452 = vmatpush.bf16.msra.mxu0 %v412
    %1453 = vmatpush.bf16.msra.mxu0 %v410
    %1454 = vmatmul.bf16.gmra.mxu0 %v1432
    %v1455 = vpop.f32.mrf.mxu0
    %v1456 = vadd.f32 %v1443, %v1455
    %v1457 = vpop.f32.mrf.mxu0
    %1458 = vdwg.mxu0
    %1459 = vmatpush.bf16.msra.mxu0 %v409
    %1460 = vmatpush.bf16.msra.mxu0 %v407
    %1461 = vmatpush.bf16.msra.mxu0 %v405
    %1462 = vmatpush.bf16.msra.mxu0 %v403
    %1463 = vmatpush.bf16.msra.mxu0 %v401
    %1464 = vmatpush.bf16.msra.mxu0 %v399
    %1465 = vmatpush.bf16.msra.mxu0 %v397
    %1466 = vmatpush.bf16.msra.mxu0 %v395
    %1467 = vmatmul.bf16.gmra.mxu0 %v1431
    %v1468 = vpop.f32.mrf.mxu0
    %v1469 = vadd.f32 0.0, %v1468
    %v1470 = vpop.f32.mrf.mxu0
    %1471 = vdwg.mxu0
    %1472 = vmatpush.bf16.msra.mxu0 %v425
    %1473 = vmatpush.bf16.msra.mxu0 %v423
    %1474 = vmatpush.bf16.msra.mxu0 %v421
    %1475 = vmatpush.bf16.msra.mxu0 %v419
    %1476 = vmatpush.bf16.msra.mxu0 %v417
    %1477 = vmatpush.bf16.msra.mxu0 %v415
    %1478 = vmatpush.bf16.msra.mxu0 %v413
    %1479 = vmatpush.bf16.msra.mxu0 %v411
    %1480 = vmatmul.bf16.gmra.mxu0 %v1432
    %v1481 = vpop.f32.mrf.mxu0
    %v1482 = vadd.f32 %v1469, %v1481
    %v1483 = vpop.f32.mrf.mxu0
    %1484 = vdwg.mxu0
    %v1485 = vmul.f32 %v1456, %v1456
    %v1486 = vsub.f32 %v1482, %v1485
    %v1487 = vmax.f32 %v1486, 0.0
    %v1488 = vsub.f32 %v1427, %v1456
    %v1489 = vadd.f32 %v1487, 1e-05
    %v1490 = vrsqrt.pop %v1489
    %v1491 = vmul.f32 %v1490, %v1489
    %v1492 = vmul.f32 %v1491, %v1490
    %v1493 = vmul.f32 0.5, %v1492
    %v1494 = vsub.f32 1.5, %v1493
    %v1495 = vmul.f32 %v1490, %v1494
    %vm1496 = vweird.f32 %v1489
    %vm1497 = vweird.f32 %v1490
    %vm1498 = vmor %vm1496, %vm1497
    %v1499 = vsel %vm1498, %v1490, %v1495
    %v1500 = vmul.f32 %v1488, %v1499
    %v1501 = vperm.slane %v776, 0
    %v1502 = vmul.f32 %v1500, %v1501
    %v1503 = vperm.slane %v777, 0
    %v1504 = vadd.f32 %v1502, %v1503
    %v1505 = vadd.f32 %v1504, %v1195
    %v1506 = vmax.f32 %v1505, 0.0
    %v1507 = vpack.c.bf16 %v1506, %v1506
    %v1508 = vld [vmem:[#allocation16] sm:$0xf]
    %v1509 = vld [vmem:[#allocation16 + $0x4] sm:$0xf]
    %v1510 = vld [vmem:[#allocation16 + $0x8] sm:$0xf]
    %v1511 = vld [vmem:[#allocation16 + $0xc] sm:$0xf]
    %v1512 = vld [vmem:[#allocation16 + $0x10] sm:$0xf]
    %v1513 = vld [vmem:[#allocation16 + $0x14] sm:$0xf]
    %v1514 = vld [vmem:[#allocation16 + $0x18] sm:$0xf]
    %v1515 = vld [vmem:[#allocation16 + $0x1c] sm:$0xf]
    %v1516 = vld [vmem:[#allocation16 + $0x20] sm:$0xf]
    %v1517 = vld [vmem:[#allocation16 + $0x24] sm:$0xf]
    %v1518 = vld [vmem:[#allocation16 + $0x28] sm:$0xf]
    %v1519 = vld [vmem:[#allocation16 + $0x2c] sm:$0xf]
    %v1520 = vld [vmem:[#allocation16 + $0x30] sm:$0xf]
    %v1521 = vld [vmem:[#allocation16 + $0x34] sm:$0xf]
    %v1522 = vld [vmem:[#allocation16 + $0x38] sm:$0xf]
    %v1523 = vld [vmem:[#allocation16 + $0x3c] sm:$0xf]
    %v1524 = vld [vmem:[%s12] sm:$0x1]
    %v1526 = vperm.slane %v1524, 0
    %v1544 = vunpack.c.l.b16 %v1508
    %v1545 = vunpack.c.l.b16 %v1509
    %v1546 = vunpack.c.l.b16 %v1510
    %v1547 = vunpack.c.l.b16 %v1511
    %v1548 = vunpack.c.l.b16 %v1512
    %v1549 = vunpack.c.l.b16 %v1513
    %v1550 = vunpack.c.l.b16 %v1514
    %v1551 = vunpack.c.l.b16 %v1515
    %v1552 = vunpack.c.l.b16 %v1516
    %v1553 = vunpack.c.l.b16 %v1517
    %v1554 = vunpack.c.l.b16 %v1518
    %v1555 = vunpack.c.l.b16 %v1519
    %v1556 = vunpack.c.l.b16 %v1520
    %v1557 = vunpack.c.l.b16 %v1521
    %v1558 = vunpack.c.l.b16 %v1522
    %v1559 = vunpack.c.l.b16 %v1523
    %v1560 = vpack.c.b16 %v1545, %v1544
    %v1561 = vpack.c.b16 %v1547, %v1546
    %v1562 = vpack.c.b16 %v1549, %v1548
    %v1563 = vpack.c.b16 %v1551, %v1550
    %v1564 = vpack.c.b16 %v1553, %v1552
    %v1565 = vpack.c.b16 %v1555, %v1554
    %v1566 = vpack.c.b16 %v1557, %v1556
    %v1567 = vpack.c.b16 %v1559, %v1558
    %1576 = vmatpush.bf16.msra.mxu0 %v1567
    %1577 = vmatpush.bf16.msra.mxu0 %v1566
    %1578 = vmatpush.bf16.msra.mxu0 %v1565
    %1579 = vmatpush.bf16.msra.mxu0 %v1564
    %1580 = vmatpush.bf16.msra.mxu0 %v1563
    %1581 = vmatpush.bf16.msra.mxu0 %v1562
    %1582 = vmatpush.bf16.msra.mxu0 %v1561
    %1583 = vmatpush.bf16.msra.mxu0 %v1560
    %1584 = vmatmul.bf16.gmra.mxu0 %v1507
    %v1585 = vpop.f32.mrf.mxu0
    %v1586 = vadd.f32 %v1526, %v1585
    %v1587 = vpop.f32.mrf.mxu0
    %1588 = vdwg.mxu0
    %1589 = vst [vmem:[#allocation20] sm:$0xff] %v1586
    // Predicated region
    $region94: #{tpu_custom_call.1} parent=1 // pred_check
      _
    $region95: #{tpu_custom_call.1} parent=1 // pred_check_branch
      %1591 = sbr.rel (0) target = $region97
    $region96: #{tpu_custom_call.1} parent=1 // pred_region
      %1593 = vsyncadd [#allocation4], 0
      %s1595 = sshll.u32 [#allocation19], 4
      %s1596 = int_to_ptr.vmem [resolvable:$true] %s1595
      %s1597 = sshll.u32 %s13, 4
      %s1598 = int_to_ptr.hbm [resolvable:$true] %s1597
      %1600 = dma.vmem_to_hbm [thread:$0]  %s1596, 128, %s1598, [#allocation4]
    $region97: #{tpu_custom_call.1} parent=1 // pred_fallthru
      _
    // Predicated region
    $region98: #{tpu_custom_call.1} parent=1 // pred_check
      _
    $region99: #{tpu_custom_call.1} parent=1 // pred_check_branch
      %1602 = sbr.rel (0) target = $region101
    $region100: #{tpu_custom_call.1} parent=1 // pred_region
      %1604 = vsyncadd [#allocation21], 0
      %s1606 = sshll.u32 [#allocation20], 4
      %s1607 = int_to_ptr.vmem [resolvable:$true] %s1606
      %s1608 = sshll.u32 %s14, 4
      %s1609 = int_to_ptr.hbm [resolvable:$true] %s1608
      %1611 = dma.vmem_to_hbm [thread:$0]  %s1607, 128, %s1609, [#allocation21]
    $region101: #{tpu_custom_call.1} parent=1 // pred_fallthru
      _
    // Predicated region
    $region102: #{tpu_custom_call.1} parent=1 // pred_check
      _
    $region103: #{tpu_custom_call.1} parent=1 // pred_check_branch
      %1613 = sbr.rel (0) target = $region105
    $region104: #{tpu_custom_call.1} parent=1 // pred_region
      %1615 = dma.done [#allocation4], 128
    $region105: #{tpu_custom_call.1} parent=1 // pred_fallthru
      _
    // Predicated region
    $region106: #{tpu_custom_call.1} parent=1 // pred_check
      _
    $region107: #{tpu_custom_call.1} parent=1 // pred_check_branch
      %1617 = sbr.rel (0) target = $region109
    $region108: #{tpu_custom_call.1} parent=1 // pred_region
      %1619 = dma.done [#allocation21], 128
    $region109: #{tpu_custom_call.1} parent=1 // pred_fallthru
      _
    %1620 = vsyncpa [#allocation3], 1
    %1621 = vsyncpa [#allocation6], 1
    %1622 = vsyncpa [#allocation9], 1
    %1623 = vsyncpa [#allocation12], 1
    %1624 = vsyncpa [#allocation15], 1
    %1625 = vsyncpa [#allocation18], 1
    %1626 = vsyncpa [#allocation4], 1
    %1627 = vsyncpa [#allocation21], 1

</llo_original>
